<compile_context>
chip_gen: v7x
topology: tpu7x:2x2x1
jax: 0.10.0
libtpu: 0.0.40
codegen_flags: <defaults>
</compile_context>

<pallas_src>
import functools

import jax
import jax.numpy as jnp
from jax import lax
from jax.experimental import pallas as pl
from jax.experimental.pallas import tpu as pltpu

TEMPER = 0.07
SMOOTH = 1e-5
LANE = 128


def _device_kind():
    # NOTE: queried on the default backend at trace time; under AOT /
    # cross-compilation this may pick the wrong generation (perf-only knob).
    try:
        return jax.devices()[0].device_kind.lower()
    except Exception:
        return ""


def _sublane_min(*dtypes):
    """Minimum legal sublane tile for the narrowest streamed dtype."""
    m = 8
    for dt in dtypes:
        isz = jnp.dtype(dt).itemsize
        m = max(m, 8 * max(1, 4 // max(1, isz)))   # 8 (f32/i32), 16 (bf16), 32 (i8)
    return m


def _pick_tiling(n_streams, c, itemsize, total_rows, sub_min):
    """Pick spatial-tile rows and VMEM limit per TPU generation (depth=2)."""
    kind = _device_kind()
    if "v7" in kind:
        # v7x: 64 MiB physical VMEM -> explicit 48 MiB scoped limit, ~24 MiB of
        # it for the input double-buffers.  Bigger tiles beat deeper pipelines.
        budget, vmem_limit = 24 * 1024 * 1024, 48 * 1024 * 1024
    else:
        # v5e / v6e: 128 MiB physical VMEM -> 64 MiB scoped limit, ~40 MiB for
        # input double-buffers (large DMAs amortize per-grid-step overhead).
        budget, vmem_limit = 40 * 1024 * 1024, 64 * 1024 * 1024
    depth = 2                                        # plain double buffering
    bytes_per_row = c * LANE * itemsize
    rows = budget // max(1, n_streams * depth * bytes_per_row)
    if rows >= total_rows:
        return total_rows, vmem_limit                # single full-extent tile
    rows = max(sub_min, (rows // sub_min) * sub_min)  # dtype sublane minimum
    return rows, vmem_limit


def _make_dice_stats_kernel(n_x, r_block, total_rows, tiles_per_chunk):
    """Kernel over grid (B, chunks, spatial_tiles).

    refs = (y, x_0..x_{n_x-1}, tp, sxs, sy); outputs are resident per
    (batch, chunk) per-lane accumulators of shape (..., C, 128).
    """

    def kernel(*refs):
        y_ref = refs[0]
        x_refs = refs[1:1 + n_x]
        tp_ref, sxs_ref, sy_ref = refs[1 + n_x:]

        # Zero the resident accumulators at the first spatial tile.
        @pl.when(pl.program_id(2) == 0)
        def _():
            tp_ref[...] = jnp.zeros_like(tp_ref)
            sxs_ref[...] = jnp.zeros_like(sxs_ref)
            sy_ref[...] = jnp.zeros_like(sy_ref)

        # Row-validity mask: kills garbage rows of the (possibly OOB) tail tile.
        tile = pl.program_id(1) * tiles_per_chunk + pl.program_id(2)
        row_ids = lax.broadcasted_iota(jnp.int32, (r_block, LANE), 0)
        valid = (row_ids + tile * r_block) < total_rows        # (R, 128)

        y = jnp.where(valid[None], y_ref[0].astype(jnp.float32), 0.0)  # (C,R,128)
        sy_ref[0, 0] += jnp.sum(y, axis=1)                     # per-lane partials

        for i in range(n_x):                                   # static unroll
            x = x_refs[i][0].astype(jnp.float32)               # (C, R, 128)
            # softmax over the channel (slab) axis: VPU + EUP, exact divide
            # (kernel is HBM-bound, so the exact reciprocal is free).
            xm = jnp.max(x, axis=0, keepdims=True)
            ex = jnp.exp(x - xm)
            xs = ex / jnp.sum(ex, axis=0, keepdims=True)
            xs = jnp.where(valid[None], xs, 0.0)
            # sublane-only partial reduce; the 128-lane reduce happens in JAX.
            tp_ref[0, 0, i] += jnp.sum(xs * y, axis=1)         # sum softmax*y
            sxs_ref[0, 0, i] += jnp.sum(xs, axis=1)            # sum softmax

    return kernel


def fused_dice_stats(x_list, y):
    """x_list: sequence of (B, C, *spatial) logits sharing the target y.

    Returns tp, sxs of shape (N, B, C) and sy of shape (B, C):
       tp[n]  = sum_spatial softmax(x_n) * y
       sxs[n] = sum_spatial softmax(x_n)
       sy     = sum_spatial y
    """
    n_x = len(x_list)
    B, C = y.shape[:2]
    S = 1
    for d in y.shape[2:]:
        S *= d

    sub_min = _sublane_min(y.dtype, *(x.dtype for x in x_list))
    itemsize = max(jnp.dtype(y.dtype).itemsize,
                   *(jnp.dtype(x.dtype).itemsize for x in x_list))

    total_rows = pl.cdiv(S, LANE)
    r_block, vmem_limit = _pick_tiling(n_x + 1, C, itemsize, total_rows, sub_min)
    num_s_tiles = pl.cdiv(total_rows, r_block)

    # v7x has two TensorCores; when B alone cannot keep both busy, split the
    # spatial reduction into per-core chunks summed in the JAX epilogue.
    n_chunks = 2 if ("v7" in _device_kind() and B % 2 == 1
                     and num_s_tiles >= 2) else 1
    tiles_per_chunk = pl.cdiv(num_s_tiles, n_chunks)

    s_pad = total_rows * LANE

    def prep(a, is_target):
        a = a.reshape(B, C, S)
        if s_pad > S:
            # Lane-remainder padding only (< 128 elems per (b, c) row).
            # Padded logits softmax to exactly one-hot on channel 0
            # (background), whose dice stats are dropped (do_bg=False);
            # padded targets are zero -> padding is exact.
            p = s_pad - S
            if is_target:
                pad = jnp.zeros((B, C, p), a.dtype)
            else:
                col = jnp.where(jnp.arange(C) == 0, 60.0, -60.0).astype(a.dtype)
                pad = jnp.broadcast_to(col[None, :, None], (B, C, p))
            a = jnp.concatenate([a, pad], axis=-1)
        return a.reshape(B, C, total_rows, LANE)               # lane-dense layout

    yp = prep(y, True)
    xps = [prep(x, False) for x in x_list]

    def in_map(b, c, s):
        # Clamp so the last (fully-masked) tile of the last chunk stays in range.
        t = jnp.minimum(c * tiles_per_chunk + s, num_s_tiles - 1)
        return (b, 0, t, 0)

    in_specs = [pl.BlockSpec((1, C, r_block, LANE), in_map)] * (n_x + 1)

    out_shapes = (
        jax.ShapeDtypeStruct((B, n_chunks, n_x, C, LANE), jnp.float32),  # tp
        jax.ShapeDtypeStruct((B, n_chunks, n_x, C, LANE), jnp.float32),  # sum(softmax)
        jax.ShapeDtypeStruct((B, n_chunks, C, LANE), jnp.float32),       # sum(y)
    )
    # Output index maps ignore the spatial axis -> blocks stay resident per
    # (batch, chunk), written back to HBM once per (b, chunk).
    out_specs = (
        pl.BlockSpec((1, 1, n_x, C, LANE), lambda b, c, s: (b, c, 0, 0, 0)),
        pl.BlockSpec((1, 1, n_x, C, LANE), lambda b, c, s: (b, c, 0, 0, 0)),
        pl.BlockSpec((1, 1, C, LANE), lambda b, c, s: (b, c, 0, 0)),
    )

    tp_p, sxs_p, sy_p = pl.pallas_call(
        _make_dice_stats_kernel(n_x, r_block, total_rows, tiles_per_chunk),
        out_shape=out_shapes,
        grid=(B, n_chunks, tiles_per_chunk),
        in_specs=in_specs,
        out_specs=out_specs,
        compiler_params=pltpu.CompilerParams(
            dimension_semantics=("parallel", "parallel", "arbitrary"),
            vmem_limit_bytes=vmem_limit),
    )(yp, *xps)

    # Final chunk + cross-lane reduce and reshuffle is tiny -> plain JAX.
    tp = jnp.transpose(tp_p.sum(axis=(1, -1)), (1, 0, 2))      # (N, B, C)
    sxs = jnp.transpose(sxs_p.sum(axis=(1, -1)), (1, 0, 2))    # (N, B, C)
    sy = sy_p.sum(axis=(1, -1))                                # (B, C)
    return tp, sxs, sy


def _soft_dice_from_stats(tp, sxs, sy, smooth=SMOOTH):
    # nnUNet SoftDiceLoss (batch_dice=False, do_bg=False):
    #   nominator   = 2*tp + smooth
    #   denominator = 2*tp + fp + fn + smooth = sum(softmax) + sum(y) + smooth
    nominator = 2.0 * tp + smooth
    denominator = sxs + sy[None] + smooth
    dc = nominator / (denominator + 1e-8)    # (N, B, C)
    dc = dc[:, :, 1:]                        # do_bg=False: drop background channel
    return -jnp.mean(dc, axis=(1, 2))        # (N,)


@functools.partial(jax.jit, static_argnames=("temper",))
def simcse_loss(sup_last_0, sup_last_1, unsup_outputs, temper=TEMPER):
    """sup_last_0 = sup_outputs[0][-1] (shared dice target),
    sup_last_1 = sup_outputs[1][-1], unsup_outputs = tuple of NCHW logits."""
    x_list = (sup_last_1,) + tuple(unsup_outputs)
    tp, sxs, sy = fused_dice_stats(x_list, sup_last_0)
    dc = _soft_dice_from_stats(tp, sxs, sy)              # (N,) dice losses
    pos_loss = jnp.exp(dc[0]) / temper
    neg_loss = jnp.sum(jnp.exp(dc[1:])) / temper
    return -jnp.log(pos_loss / neg_loss)


def _reference_simcse(sup_last_0, sup_last_1, unsup_outputs, temper=TEMPER):
    """Pure-JAX reference mirroring the PyTorch module (for self-check)."""
    def dc(x, y):
        xs = jax.nn.softmax(x.astype(jnp.float32), axis=1)
        yf = y.astype(jnp.float32)
        axes = tuple(range(2, x.ndim))
        tp = jnp.sum(xs * yf, axis=axes)
        fp = jnp.sum(xs * (1.0 - yf), axis=axes)
        fn = jnp.sum((1.0 - xs) * yf, axis=axes)
        d = (2.0 * tp + SMOOTH) / (2.0 * tp + fp + fn + SMOOTH + 1e-8)
        return -jnp.mean(d[:, 1:])
    pos = jnp.exp(dc(sup_last_1, sup_last_0)) / temper
    neg = 0.0
    for u in unsup_outputs:
        neg = neg + jnp.exp(dc(u, sup_last_0)) / temper
    return -jnp.log(pos / neg)


if __name__ == "__main__":
    B, C, H, W = 2, 4, 16, 16
    key = jax.random.PRNGKey(0)
    k = jax.random.split(key, 8)

    # sup_outputs: two deep-supervision branches; only [-1] is used by the loss.
    sup_outputs = (
        [jax.random.normal(k[0], (B, C, H // 2, W // 2), jnp.float32),
         jax.random.normal(k[1], (B, C, H, W), jnp.float32)],
        [jax.random.normal(k[2], (B, C, H // 2, W // 2), jnp.float32),
         jax.random.normal(k[3], (B, C, H, W), jnp.float32)],
    )
    # unsup_outputs: list of full-resolution logits.
    unsup_outputs = [
        jax.random.normal(k[4], (B, C, H, W), jnp.float32),
        jax.random.normal(k[5], (B, C, H, W), jnp.float32),
        jax.random.normal(k[6], (B, C, H, W), jnp.float32),
    ]

    loss = simcse_loss(sup_outputs[0][-1], sup_outputs[1][-1],
                       tuple(unsup_outputs))
    loss = jax.block_until_ready(loss)

    ref = jax.block_until_ready(
        _reference_simcse(sup_outputs[0][-1], sup_outputs[1][-1],
                          tuple(unsup_outputs)))

    assert loss.shape == () and jnp.isfinite(loss)
    assert jnp.allclose(loss, ref, rtol=1e-3, atol=1e-3), (loss, ref)
    print("KERNEL_OK")
</pallas_src>

<mosaic_0001>
module attributes {stable_mosaic.version = 11 : i64} {
  func.func @kernel(%arg0: i32, %arg1: i32, %arg2: i32, %arg3: memref<1x4x2x128xf32, #tpu.memory_space<vmem>>, %arg4: memref<1x4x2x128xf32, #tpu.memory_space<vmem>>, %arg5: memref<1x4x2x128xf32, #tpu.memory_space<vmem>>, %arg6: memref<1x4x2x128xf32, #tpu.memory_space<vmem>>, %arg7: memref<1x4x2x128xf32, #tpu.memory_space<vmem>>, %arg8: memref<1x1x4x4x128xf32, #tpu.memory_space<vmem>>, %arg9: memref<1x1x4x4x128xf32, #tpu.memory_space<vmem>>, %arg10: memref<1x1x4x128xf32, #tpu.memory_space<vmem>>) attributes {dimension_semantics = [#tpu.dimension_semantics<parallel>, #tpu.dimension_semantics<parallel>, #tpu.dimension_semantics<arbitrary>], iteration_bounds = array<i64: 2, 1, 1>, scalar_prefetch = 0 : i64, scratch_operands = 0 : i64, tpu.core_type = #tpu.core_type<tc>, window_params = [{transform_indices = @transform_0, window_bounds = array<i64: 1, 4, 2, 128>}, {transform_indices = @transform_1, window_bounds = array<i64: 1, 4, 2, 128>}, {transform_indices = @transform_2, window_bounds = array<i64: 1, 4, 2, 128>}, {transform_indices = @transform_3, window_bounds = array<i64: 1, 4, 2, 128>}, {transform_indices = @transform_4, window_bounds = array<i64: 1, 4, 2, 128>}, {transform_indices = @transform_5, window_bounds = array<i64: 1, 1, 4, 4, 128>}, {transform_indices = @transform_6, window_bounds = array<i64: 1, 1, 4, 4, 128>}, {transform_indices = @transform_7, window_bounds = array<i64: 1, 1, 4, 128>}]} {
    %c0_i32 = arith.constant 0 : i32
    %0 = arith.cmpi eq, %arg2, %c0_i32 : i32
    %1 = arith.extui %0 : i1 to i32
    %c0_i32_0 = arith.constant 0 : i32
    %2 = arith.cmpi ne, %1, %c0_i32_0 : i32
    scf.if %2 {
      %cst_127 = arith.constant 0.000000e+00 : f32
      %149 = vector.broadcast %cst_127 : f32 to vector<1x1x4x4x128xf32>
      %c0_128 = arith.constant 0 : index
      %c0_129 = arith.constant 0 : index
      %c0_130 = arith.constant 0 : index
      %c0_131 = arith.constant 0 : index
      %c0_132 = arith.constant 0 : index
      %150 = vector.load %arg8[%c0_128, %c0_129, %c0_130, %c0_131, %c0_132] : memref<1x1x4x4x128xf32, #tpu.memory_space<vmem>>, vector<1x1x4x4x128xf32>
      tpu.vector_store %arg8[%c0_128, %c0_129, %c0_130, %c0_131, %c0_132], %149 {strides = array<i32>} : memref<1x1x4x4x128xf32, #tpu.memory_space<vmem>>, vector<1x1x4x4x128xf32>,
      %cst_133 = arith.constant 0.000000e+00 : f32
      %151 = vector.broadcast %cst_133 : f32 to vector<1x1x4x4x128xf32>
      %c0_134 = arith.constant 0 : index
      %c0_135 = arith.constant 0 : index
      %c0_136 = arith.constant 0 : index
      %c0_137 = arith.constant 0 : index
      %c0_138 = arith.constant 0 : index
      %152 = vector.load %arg9[%c0_134, %c0_135, %c0_136, %c0_137, %c0_138] : memref<1x1x4x4x128xf32, #tpu.memory_space<vmem>>, vector<1x1x4x4x128xf32>
      tpu.vector_store %arg9[%c0_134, %c0_135, %c0_136, %c0_137, %c0_138], %151 {strides = array<i32>} : memref<1x1x4x4x128xf32, #tpu.memory_space<vmem>>, vector<1x1x4x4x128xf32>,
      %cst_139 = arith.constant 0.000000e+00 : f32
      %153 = vector.broadcast %cst_139 : f32 to vector<1x1x4x128xf32>
      %c0_140 = arith.constant 0 : index
      %c0_141 = arith.constant 0 : index
      %c0_142 = arith.constant 0 : index
      %c0_143 = arith.constant 0 : index
      %154 = vector.load %arg10[%c0_140, %c0_141, %c0_142, %c0_143] : memref<1x1x4x128xf32, #tpu.memory_space<vmem>>, vector<1x1x4x128xf32>
      tpu.vector_store %arg10[%c0_140, %c0_141, %c0_142, %c0_143], %153 {strides = array<i32>} : memref<1x1x4x128xf32, #tpu.memory_space<vmem>>, vector<1x1x4x128xf32>,
    } else {
    }
    %c1_i32 = arith.constant 1 : i32
    %3 = arith.muli %arg1, %c1_i32 : i32
    %4 = arith.addi %3, %arg2 : i32
    %5 = tpu.iota {dimensions = array<i32: 0>} : vector<2x128xi32>
    %c2_i32 = arith.constant 2 : i32
    %6 = arith.muli %4, %c2_i32 : i32
    %7 = vector.broadcast %6 : i32 to vector<2x128xi32>
    %8 = arith.addi %5, %7 : vector<2x128xi32>
    %c2_i32_1 = arith.constant 2 : i32
    %9 = vector.broadcast %c2_i32_1 : i32 to vector<2x128xi32>
    %10 = arith.cmpi slt, %8, %9 : vector<2x128xi32>
    %11 = vector.shape_cast %10 : vector<2x128xi1> to vector<1x2x128xi1>
    %c0 = arith.constant 0 : index
    %c0_2 = arith.constant 0 : index
    %c0_3 = arith.constant 0 : index
    %c0_4 = arith.constant 0 : index
    %12 = vector.load %arg3[%c0, %c0_2, %c0_3, %c0_4] : memref<1x4x2x128xf32, #tpu.memory_space<vmem>>, vector<1x4x2x128xf32>
    %13 = vector.shape_cast %12 : vector<1x4x2x128xf32> to vector<4x2x128xf32>
    %cst = arith.constant 0.000000e+00 : f32
    %14 = vector.shape_cast %11 : vector<1x2x128xi1> to vector<1x2x128xi1>
    %15 = vector.broadcast %14 : vector<1x2x128xi1> to vector<4x2x128xi1>
    %16 = vector.broadcast %cst : f32 to vector<4x2x128xf32>
    %17 = arith.select %15, %13, %16 : vector<4x2x128xi1>, vector<4x2x128xf32>
    %c0_5 = arith.constant 0 : index
    %c0_6 = arith.constant 0 : index
    %c0_7 = arith.constant 0 : index
    %c0_8 = arith.constant 0 : index
    %18 = vector.load %arg10[%c0_5, %c0_6, %c0_7, %c0_8] : memref<1x1x4x128xf32, #tpu.memory_space<vmem>>, vector<1x1x4x128xf32>
    %19 = vector.shape_cast %18 : vector<1x1x4x128xf32> to vector<4x128xf32>
    %cst_9 = arith.constant dense<0.000000e+00> : vector<4x128xf32>
    %20 = vector.multi_reduction <add>, %17, %cst_9 [1] : vector<4x2x128xf32> to vector<4x128xf32>
    %21 = arith.addf %19, %20 : vector<4x128xf32>
    %c0_10 = arith.constant 0 : index
    %c0_11 = arith.constant 0 : index
    %c0_12 = arith.constant 0 : index
    %c0_13 = arith.constant 0 : index
    %22 = vector.load %arg10[%c0_10, %c0_11, %c0_12, %c0_13] : memref<1x1x4x128xf32, #tpu.memory_space<vmem>>, vector<1x1x4x128xf32>
    %23 = vector.shape_cast %22 : vector<1x1x4x128xf32> to vector<4x128xf32>
    %24 = vector.shape_cast %21 : vector<4x128xf32> to vector<1x1x4x128xf32>
    tpu.vector_store %arg10[%c0_10, %c0_11, %c0_12, %c0_13], %24 {strides = array<i32>} : memref<1x1x4x128xf32, #tpu.memory_space<vmem>>, vector<1x1x4x128xf32>,
    %c0_14 = arith.constant 0 : index
    %c0_15 = arith.constant 0 : index
    %c0_16 = arith.constant 0 : index
    %c0_17 = arith.constant 0 : index
    %25 = vector.load %arg4[%c0_14, %c0_15, %c0_16, %c0_17] : memref<1x4x2x128xf32, #tpu.memory_space<vmem>>, vector<1x4x2x128xf32>
    %26 = vector.shape_cast %25 : vector<1x4x2x128xf32> to vector<4x2x128xf32>
    %cst_18 = arith.constant dense<0xFF800000> : vector<2x128xf32>
    %27 = vector.multi_reduction <maximumf>, %26, %cst_18 [0] : vector<4x2x128xf32> to vector<2x128xf32>
    %28 = vector.shape_cast %27 : vector<2x128xf32> to vector<1x2x128xf32>
    %29 = vector.broadcast %28 : vector<1x2x128xf32> to vector<4x2x128xf32>
    %30 = arith.subf %26, %29 : vector<4x2x128xf32>
    %31 = math.exp %30 : vector<4x2x128xf32>
    %cst_19 = arith.constant dense<0.000000e+00> : vector<2x128xf32>
    %32 = vector.multi_reduction <add>, %31, %cst_19 [0] : vector<4x2x128xf32> to vector<2x128xf32>
    %33 = vector.shape_cast %32 : vector<2x128xf32> to vector<1x2x128xf32>
    %34 = vector.broadcast %33 : vector<1x2x128xf32> to vector<4x2x128xf32>
    %35 = arith.divf %31, %34 : vector<4x2x128xf32>
    %36 = vector.shape_cast %10 : vector<2x128xi1> to vector<1x2x128xi1>
    %cst_20 = arith.constant 0.000000e+00 : f32
    %37 = vector.shape_cast %36 : vector<1x2x128xi1> to vector<1x2x128xi1>
    %38 = vector.broadcast %37 : vector<1x2x128xi1> to vector<4x2x128xi1>
    %39 = vector.broadcast %cst_20 : f32 to vector<4x2x128xf32>
    %40 = arith.select %38, %35, %39 : vector<4x2x128xi1>, vector<4x2x128xf32>
    %c0_21 = arith.constant 0 : index
    %c0_22 = arith.constant 0 : index
    %c0_23 = arith.constant 0 : index
    %c0_24 = arith.constant 0 : index
    %c0_25 = arith.constant 0 : index
    %41 = vector.load %arg8[%c0_21, %c0_22, %c0_23, %c0_24, %c0_25] : memref<1x1x4x4x128xf32, #tpu.memory_space<vmem>>, vector<1x1x1x4x128xf32>
    %42 = vector.shape_cast %41 : vector<1x1x1x4x128xf32> to vector<4x128xf32>
    %43 = arith.mulf %40, %17 : vector<4x2x128xf32>
    %cst_26 = arith.constant dense<0.000000e+00> : vector<4x128xf32>
    %44 = vector.multi_reduction <add>, %43, %cst_26 [1] : vector<4x2x128xf32> to vector<4x128xf32>
    %45 = arith.addf %42, %44 : vector<4x128xf32>
    %c0_27 = arith.constant 0 : index
    %c0_28 = arith.constant 0 : index
    %c0_29 = arith.constant 0 : index
    %c0_30 = arith.constant 0 : index
    %c0_31 = arith.constant 0 : index
    %46 = vector.load %arg8[%c0_27, %c0_28, %c0_29, %c0_30, %c0_31] : memref<1x1x4x4x128xf32, #tpu.memory_space<vmem>>, vector<1x1x1x4x128xf32>
    %47 = vector.shape_cast %46 : vector<1x1x1x4x128xf32> to vector<4x128xf32>
    %48 = vector.shape_cast %45 : vector<4x128xf32> to vector<1x1x1x4x128xf32>
    tpu.vector_store %arg8[%c0_27, %c0_28, %c0_29, %c0_30, %c0_31], %48 {strides = array<i32>} : memref<1x1x4x4x128xf32, #tpu.memory_space<vmem>>, vector<1x1x1x4x128xf32>,
    %c0_32 = arith.constant 0 : index
    %c0_33 = arith.constant 0 : index
    %c0_34 = arith.constant 0 : index
    %c0_35 = arith.constant 0 : index
    %c0_36 = arith.constant 0 : index
    %49 = vector.load %arg9[%c0_32, %c0_33, %c0_34, %c0_35, %c0_36] : memref<1x1x4x4x128xf32, #tpu.memory_space<vmem>>, vector<1x1x1x4x128xf32>
    %50 = vector.shape_cast %49 : vector<1x1x1x4x128xf32> to vector<4x128xf32>
    %cst_37 = arith.constant dense<0.000000e+00> : vector<4x128xf32>
    %51 = vector.multi_reduction <add>, %40, %cst_37 [1] : vector<4x2x128xf32> to vector<4x128xf32>
    %52 = arith.addf %50, %51 : vector<4x128xf32>
    %c0_38 = arith.constant 0 : index
    %c0_39 = arith.constant 0 : index
    %c0_40 = arith.constant 0 : index
    %c0_41 = arith.constant 0 : index
    %c0_42 = arith.constant 0 : index
    %53 = vector.load %arg9[%c0_38, %c0_39, %c0_40, %c0_41, %c0_42] : memref<1x1x4x4x128xf32, #tpu.memory_space<vmem>>, vector<1x1x1x4x128xf32>
    %54 = vector.shape_cast %53 : vector<1x1x1x4x128xf32> to vector<4x128xf32>
    %55 = vector.shape_cast %52 : vector<4x128xf32> to vector<1x1x1x4x128xf32>
    tpu.vector_store %arg9[%c0_38, %c0_39, %c0_40, %c0_41, %c0_42], %55 {strides = array<i32>} : memref<1x1x4x4x128xf32, #tpu.memory_space<vmem>>, vector<1x1x1x4x128xf32>,
    %c0_43 = arith.constant 0 : index
    %c0_44 = arith.constant 0 : index
    %c0_45 = arith.constant 0 : index
    %c0_46 = arith.constant 0 : index
    %56 = vector.load %arg5[%c0_43, %c0_44, %c0_45, %c0_46] : memref<1x4x2x128xf32, #tpu.memory_space<vmem>>, vector<1x4x2x128xf32>
    %57 = vector.shape_cast %56 : vector<1x4x2x128xf32> to vector<4x2x128xf32>
    %cst_47 = arith.constant dense<0xFF800000> : vector<2x128xf32>
    %58 = vector.multi_reduction <maximumf>, %57, %cst_47 [0] : vector<4x2x128xf32> to vector<2x128xf32>
    %59 = vector.shape_cast %58 : vector<2x128xf32> to vector<1x2x128xf32>
    %60 = vector.broadcast %59 : vector<1x2x128xf32> to vector<4x2x128xf32>
    %61 = arith.subf %57, %60 : vector<4x2x128xf32>
    %62 = math.exp %61 : vector<4x2x128xf32>
    %cst_48 = arith.constant dense<0.000000e+00> : vector<2x128xf32>
    %63 = vector.multi_reduction <add>, %62, %cst_48 [0] : vector<4x2x128xf32> to vector<2x128xf32>
    %64 = vector.shape_cast %63 : vector<2x128xf32> to vector<1x2x128xf32>
    %65 = vector.broadcast %64 : vector<1x2x128xf32> to vector<4x2x128xf32>
    %66 = arith.divf %62, %65 : vector<4x2x128xf32>
    %67 = vector.shape_cast %10 : vector<2x128xi1> to vector<1x2x128xi1>
    %cst_49 = arith.constant 0.000000e+00 : f32
    %68 = vector.shape_cast %67 : vector<1x2x128xi1> to vector<1x2x128xi1>
    %69 = vector.broadcast %68 : vector<1x2x128xi1> to vector<4x2x128xi1>
    %70 = vector.broadcast %cst_49 : f32 to vector<4x2x128xf32>
    %71 = arith.select %69, %66, %70 : vector<4x2x128xi1>, vector<4x2x128xf32>
    %c0_50 = arith.constant 0 : index
    %c0_51 = arith.constant 0 : index
    %c1 = arith.constant 1 : index
    %c0_52 = arith.constant 0 : index
    %c0_53 = arith.constant 0 : index
    %72 = vector.load %arg8[%c0_50, %c0_51, %c1, %c0_52, %c0_53] : memref<1x1x4x4x128xf32, #tpu.memory_space<vmem>>, vector<1x1x1x4x128xf32>
    %73 = vector.shape_cast %72 : vector<1x1x1x4x128xf32> to vector<4x128xf32>
    %74 = arith.mulf %71, %17 : vector<4x2x128xf32>
    %cst_54 = arith.constant dense<0.000000e+00> : vector<4x128xf32>
    %75 = vector.multi_reduction <add>, %74, %cst_54 [1] : vector<4x2x128xf32> to vector<4x128xf32>
    %76 = arith.addf %73, %75 : vector<4x128xf32>
    %c0_55 = arith.constant 0 : index
    %c0_56 = arith.constant 0 : index
    %c1_57 = arith.constant 1 : index
    %c0_58 = arith.constant 0 : index
    %c0_59 = arith.constant 0 : index
    %77 = vector.load %arg8[%c0_55, %c0_56, %c1_57, %c0_58, %c0_59] : memref<1x1x4x4x128xf32, #tpu.memory_space<vmem>>, vector<1x1x1x4x128xf32>
    %78 = vector.shape_cast %77 : vector<1x1x1x4x128xf32> to vector<4x128xf32>
    %79 = vector.shape_cast %76 : vector<4x128xf32> to vector<1x1x1x4x128xf32>
    tpu.vector_store %arg8[%c0_55, %c0_56, %c1_57, %c0_58, %c0_59], %79 {strides = array<i32>} : memref<1x1x4x4x128xf32, #tpu.memory_space<vmem>>, vector<1x1x1x4x128xf32>,
    %c0_60 = arith.constant 0 : index
    %c0_61 = arith.constant 0 : index
    %c1_62 = arith.constant 1 : index
    %c0_63 = arith.constant 0 : index
    %c0_64 = arith.constant 0 : index
    %80 = vector.load %arg9[%c0_60, %c0_61, %c1_62, %c0_63, %c0_64] : memref<1x1x4x4x128xf32, #tpu.memory_space<vmem>>, vector<1x1x1x4x128xf32>
    %81 = vector.shape_cast %80 : vector<1x1x1x4x128xf32> to vector<4x128xf32>
    %cst_65 = arith.constant dense<0.000000e+00> : vector<4x128xf32>
    %82 = vector.multi_reduction <add>, %71, %cst_65 [1] : vector<4x2x128xf32> to vector<4x128xf32>
    %83 = arith.addf %81, %82 : vector<4x128xf32>
    %c0_66 = arith.constant 0 : index
    %c0_67 = arith.constant 0 : index
    %c1_68 = arith.constant 1 : index
    %c0_69 = arith.constant 0 : index
    %c0_70 = arith.constant 0 : index
    %84 = vector.load %arg9[%c0_66, %c0_67, %c1_68, %c0_69, %c0_70] : memref<1x1x4x4x128xf32, #tpu.memory_space<vmem>>, vector<1x1x1x4x128xf32>
    %85 = vector.shape_cast %84 : vector<1x1x1x4x128xf32> to vector<4x128xf32>
    %86 = vector.shape_cast %83 : vector<4x128xf32> to vector<1x1x1x4x128xf32>
    tpu.vector_store %arg9[%c0_66, %c0_67, %c1_68, %c0_69, %c0_70], %86 {strides = array<i32>} : memref<1x1x4x4x128xf32, #tpu.memory_space<vmem>>, vector<1x1x1x4x128xf32>,
    %c0_71 = arith.constant 0 : index
    %c0_72 = arith.constant 0 : index
    %c0_73 = arith.constant 0 : index
    %c0_74 = arith.constant 0 : index
    %87 = vector.load %arg6[%c0_71, %c0_72, %c0_73, %c0_74] : memref<1x4x2x128xf32, #tpu.memory_space<vmem>>, vector<1x4x2x128xf32>
    %88 = vector.shape_cast %87 : vector<1x4x2x128xf32> to vector<4x2x128xf32>
    %cst_75 = arith.constant dense<0xFF800000> : vector<2x128xf32>
    %89 = vector.multi_reduction <maximumf>, %88, %cst_75 [0] : vector<4x2x128xf32> to vector<2x128xf32>
    %90 = vector.shape_cast %89 : vector<2x128xf32> to vector<1x2x128xf32>
    %91 = vector.broadcast %90 : vector<1x2x128xf32> to vector<4x2x128xf32>
    %92 = arith.subf %88, %91 : vector<4x2x128xf32>
    %93 = math.exp %92 : vector<4x2x128xf32>
    %cst_76 = arith.constant dense<0.000000e+00> : vector<2x128xf32>
    %94 = vector.multi_reduction <add>, %93, %cst_76 [0] : vector<4x2x128xf32> to vector<2x128xf32>
    %95 = vector.shape_cast %94 : vector<2x128xf32> to vector<1x2x128xf32>
    %96 = vector.broadcast %95 : vector<1x2x128xf32> to vector<4x2x128xf32>
    %97 = arith.divf %93, %96 : vector<4x2x128xf32>
    %98 = vector.shape_cast %10 : vector<2x128xi1> to vector<1x2x128xi1>
    %cst_77 = arith.constant 0.000000e+00 : f32
    %99 = vector.shape_cast %98 : vector<1x2x128xi1> to vector<1x2x128xi1>
    %100 = vector.broadcast %99 : vector<1x2x128xi1> to vector<4x2x128xi1>
    %101 = vector.broadcast %cst_77 : f32 to vector<4x2x128xf32>
    %102 = arith.select %100, %97, %101 : vector<4x2x128xi1>, vector<4x2x128xf32>
    %c0_78 = arith.constant 0 : index
    %c0_79 = arith.constant 0 : index
    %c2 = arith.constant 2 : index
    %c0_80 = arith.constant 0 : index
    %c0_81 = arith.constant 0 : index
    %103 = vector.load %arg8[%c0_78, %c0_79, %c2, %c0_80, %c0_81] : memref<1x1x4x4x128xf32, #tpu.memory_space<vmem>>, vector<1x1x1x4x128xf32>
    %104 = vector.shape_cast %103 : vector<1x1x1x4x128xf32> to vector<4x128xf32>
    %105 = arith.mulf %102, %17 : vector<4x2x128xf32>
    %cst_82 = arith.constant dense<0.000000e+00> : vector<4x128xf32>
    %106 = vector.multi_reduction <add>, %105, %cst_82 [1] : vector<4x2x128xf32> to vector<4x128xf32>
    %107 = arith.addf %104, %106 : vector<4x128xf32>
    %c0_83 = arith.constant 0 : index
    %c0_84 = arith.constant 0 : index
    %c2_85 = arith.constant 2 : index
    %c0_86 = arith.constant 0 : index
    %c0_87 = arith.constant 0 : index
    %108 = vector.load %arg8[%c0_83, %c0_84, %c2_85, %c0_86, %c0_87] : memref<1x1x4x4x128xf32, #tpu.memory_space<vmem>>, vector<1x1x1x4x128xf32>
    %109 = vector.shape_cast %108 : vector<1x1x1x4x128xf32> to vector<4x128xf32>
    %110 = vector.shape_cast %107 : vector<4x128xf32> to vector<1x1x1x4x128xf32>
    tpu.vector_store %arg8[%c0_83, %c0_84, %c2_85, %c0_86, %c0_87], %110 {strides = array<i32>} : memref<1x1x4x4x128xf32, #tpu.memory_space<vmem>>, vector<1x1x1x4x128xf32>,
    %c0_88 = arith.constant 0 : index
    %c0_89 = arith.constant 0 : index
    %c2_90 = arith.constant 2 : index
    %c0_91 = arith.constant 0 : index
    %c0_92 = arith.constant 0 : index
    %111 = vector.load %arg9[%c0_88, %c0_89, %c2_90, %c0_91, %c0_92] : memref<1x1x4x4x128xf32, #tpu.memory_space<vmem>>, vector<1x1x1x4x128xf32>
    %112 = vector.shape_cast %111 : vector<1x1x1x4x128xf32> to vector<4x128xf32>
    %cst_93 = arith.constant dense<0.000000e+00> : vector<4x128xf32>
    %113 = vector.multi_reduction <add>, %102, %cst_93 [1] : vector<4x2x128xf32> to vector<4x128xf32>
    %114 = arith.addf %112, %113 : vector<4x128xf32>
    %c0_94 = arith.constant 0 : index
    %c0_95 = arith.constant 0 : index
    %c2_96 = arith.constant 2 : index
    %c0_97 = arith.constant 0 : index
    %c0_98 = arith.constant 0 : index
    %115 = vector.load %arg9[%c0_94, %c0_95, %c2_96, %c0_97, %c0_98] : memref<1x1x4x4x128xf32, #tpu.memory_space<vmem>>, vector<1x1x1x4x128xf32>
    %116 = vector.shape_cast %115 : vector<1x1x1x4x128xf32> to vector<4x128xf32>
    %117 = vector.shape_cast %114 : vector<4x128xf32> to vector<1x1x1x4x128xf32>
    tpu.vector_store %arg9[%c0_94, %c0_95, %c2_96, %c0_97, %c0_98], %117 {strides = array<i32>} : memref<1x1x4x4x128xf32, #tpu.memory_space<vmem>>, vector<1x1x1x4x128xf32>,
    %c0_99 = arith.constant 0 : index
    %c0_100 = arith.constant 0 : index
    %c0_101 = arith.constant 0 : index
    %c0_102 = arith.constant 0 : index
    %118 = vector.load %arg7[%c0_99, %c0_100, %c0_101, %c0_102] : memref<1x4x2x128xf32, #tpu.memory_space<vmem>>, vector<1x4x2x128xf32>
    %119 = vector.shape_cast %118 : vector<1x4x2x128xf32> to vector<4x2x128xf32>
    %cst_103 = arith.constant dense<0xFF800000> : vector<2x128xf32>
    %120 = vector.multi_reduction <maximumf>, %119, %cst_103 [0] : vector<4x2x128xf32> to vector<2x128xf32>
    %121 = vector.shape_cast %120 : vector<2x128xf32> to vector<1x2x128xf32>
    %122 = vector.broadcast %121 : vector<1x2x128xf32> to vector<4x2x128xf32>
    %123 = arith.subf %119, %122 : vector<4x2x128xf32>
    %124 = math.exp %123 : vector<4x2x128xf32>
    %cst_104 = arith.constant dense<0.000000e+00> : vector<2x128xf32>
    %125 = vector.multi_reduction <add>, %124, %cst_104 [0] : vector<4x2x128xf32> to vector<2x128xf32>
    %126 = vector.shape_cast %125 : vector<2x128xf32> to vector<1x2x128xf32>
    %127 = vector.broadcast %126 : vector<1x2x128xf32> to vector<4x2x128xf32>
    %128 = arith.divf %124, %127 : vector<4x2x128xf32>
    %129 = vector.shape_cast %10 : vector<2x128xi1> to vector<1x2x128xi1>
    %cst_105 = arith.constant 0.000000e+00 : f32
    %130 = vector.shape_cast %129 : vector<1x2x128xi1> to vector<1x2x128xi1>
    %131 = vector.broadcast %130 : vector<1x2x128xi1> to vector<4x2x128xi1>
    %132 = vector.broadcast %cst_105 : f32 to vector<4x2x128xf32>
    %133 = arith.select %131, %128, %132 : vector<4x2x128xi1>, vector<4x2x128xf32>
    %c0_106 = arith.constant 0 : index
    %c0_107 = arith.constant 0 : index
    %c3 = arith.constant 3 : index
    %c0_108 = arith.constant 0 : index
    %c0_109 = arith.constant 0 : index
    %134 = vector.load %arg8[%c0_106, %c0_107, %c3, %c0_108, %c0_109] : memref<1x1x4x4x128xf32, #tpu.memory_space<vmem>>, vector<1x1x1x4x128xf32>
    %135 = vector.shape_cast %134 : vector<1x1x1x4x128xf32> to vector<4x128xf32>
    %136 = arith.mulf %133, %17 : vector<4x2x128xf32>
    %cst_110 = arith.constant dense<0.000000e+00> : vector<4x128xf32>
    %137 = vector.multi_reduction <add>, %136, %cst_110 [1] : vector<4x2x128xf32> to vector<4x128xf32>
    %138 = arith.addf %135, %137 : vector<4x128xf32>
    %c0_111 = arith.constant 0 : index
    %c0_112 = arith.constant 0 : index
    %c3_113 = arith.constant 3 : index
    %c0_114 = arith.constant 0 : index
    %c0_115 = arith.constant 0 : index
    %139 = vector.load %arg8[%c0_111, %c0_112, %c3_113, %c0_114, %c0_115] : memref<1x1x4x4x128xf32, #tpu.memory_space<vmem>>, vector<1x1x1x4x128xf32>
    %140 = vector.shape_cast %139 : vector<1x1x1x4x128xf32> to vector<4x128xf32>
    %141 = vector.shape_cast %138 : vector<4x128xf32> to vector<1x1x1x4x128xf32>
    tpu.vector_store %arg8[%c0_111, %c0_112, %c3_113, %c0_114, %c0_115], %141 {strides = array<i32>} : memref<1x1x4x4x128xf32, #tpu.memory_space<vmem>>, vector<1x1x1x4x128xf32>,
    %c0_116 = arith.constant 0 : index
    %c0_117 = arith.constant 0 : index
    %c3_118 = arith.constant 3 : index
    %c0_119 = arith.constant 0 : index
    %c0_120 = arith.constant 0 : index
    %142 = vector.load %arg9[%c0_116, %c0_117, %c3_118, %c0_119, %c0_120] : memref<1x1x4x4x128xf32, #tpu.memory_space<vmem>>, vector<1x1x1x4x128xf32>
    %143 = vector.shape_cast %142 : vector<1x1x1x4x128xf32> to vector<4x128xf32>
    %cst_121 = arith.constant dense<0.000000e+00> : vector<4x128xf32>
    %144 = vector.multi_reduction <add>, %133, %cst_121 [1] : vector<4x2x128xf32> to vector<4x128xf32>
    %145 = arith.addf %143, %144 : vector<4x128xf32>
    %c0_122 = arith.constant 0 : index
    %c0_123 = arith.constant 0 : index
    %c3_124 = arith.constant 3 : index
    %c0_125 = arith.constant 0 : index
    %c0_126 = arith.constant 0 : index
    %146 = vector.load %arg9[%c0_122, %c0_123, %c3_124, %c0_125, %c0_126] : memref<1x1x4x4x128xf32, #tpu.memory_space<vmem>>, vector<1x1x1x4x128xf32>
    %147 = vector.shape_cast %146 : vector<1x1x1x4x128xf32> to vector<4x128xf32>
    %148 = vector.shape_cast %145 : vector<4x128xf32> to vector<1x1x1x4x128xf32>
    tpu.vector_store %arg9[%c0_122, %c0_123, %c3_124, %c0_125, %c0_126], %148 {strides = array<i32>} : memref<1x1x4x4x128xf32, #tpu.memory_space<vmem>>, vector<1x1x1x4x128xf32>,
    return
  }
  func.func @transform_0(%arg0: i32, %arg1: i32, %arg2: i32) -> (i32, i32, i32, i32) {
    %c1_i32 = arith.constant 1 : i32
    %0 = arith.muli %arg1, %c1_i32 : i32
    %1 = arith.addi %0, %arg2 : i32
    %c0_i32 = arith.constant 0 : i32
    %2 = arith.minsi %1, %c0_i32 : i32
    %c0_i32_0 = arith.constant 0 : i32
    %c0_i32_1 = arith.constant 0 : i32
    %c0_i32_2 = arith.constant 0 : i32
    return %arg0, %c0_i32_0, %2, %c0_i32_1 : i32, i32, i32, i32
  }
  func.func @transform_1(%arg0: i32, %arg1: i32, %arg2: i32) -> (i32, i32, i32, i32) {
    %c1_i32 = arith.constant 1 : i32
    %0 = arith.muli %arg1, %c1_i32 : i32
    %1 = arith.addi %0, %arg2 : i32
    %c0_i32 = arith.constant 0 : i32
    %2 = arith.minsi %1, %c0_i32 : i32
    %c0_i32_0 = arith.constant 0 : i32
    %c0_i32_1 = arith.constant 0 : i32
    %c0_i32_2 = arith.constant 0 : i32
    return %arg0, %c0_i32_0, %2, %c0_i32_1 : i32, i32, i32, i32
  }
  func.func @transform_2(%arg0: i32, %arg1: i32, %arg2: i32) -> (i32, i32, i32, i32) {
    %c1_i32 = arith.constant 1 : i32
    %0 = arith.muli %arg1, %c1_i32 : i32
    %1 = arith.addi %0, %arg2 : i32
    %c0_i32 = arith.constant 0 : i32
    %2 = arith.minsi %1, %c0_i32 : i32
    %c0_i32_0 = arith.constant 0 : i32
    %c0_i32_1 = arith.constant 0 : i32
    %c0_i32_2 = arith.constant 0 : i32
    return %arg0, %c0_i32_0, %2, %c0_i32_1 : i32, i32, i32, i32
  }
  func.func @transform_3(%arg0: i32, %arg1: i32, %arg2: i32) -> (i32, i32, i32, i32) {
    %c1_i32 = arith.constant 1 : i32
    %0 = arith.muli %arg1, %c1_i32 : i32
    %1 = arith.addi %0, %arg2 : i32
    %c0_i32 = arith.constant 0 : i32
    %2 = arith.minsi %1, %c0_i32 : i32
    %c0_i32_0 = arith.constant 0 : i32
    %c0_i32_1 = arith.constant 0 : i32
    %c0_i32_2 = arith.constant 0 : i32
    return %arg0, %c0_i32_0, %2, %c0_i32_1 : i32, i32, i32, i32
  }
  func.func @transform_4(%arg0: i32, %arg1: i32, %arg2: i32) -> (i32, i32, i32, i32) {
    %c1_i32 = arith.constant 1 : i32
    %0 = arith.muli %arg1, %c1_i32 : i32
    %1 = arith.addi %0, %arg2 : i32
    %c0_i32 = arith.constant 0 : i32
    %2 = arith.minsi %1, %c0_i32 : i32
    %c0_i32_0 = arith.constant 0 : i32
    %c0_i32_1 = arith.constant 0 : i32
    %c0_i32_2 = arith.constant 0 : i32
    return %arg0, %c0_i32_0, %2, %c0_i32_1 : i32, i32, i32, i32
  }
  func.func @transform_5(%arg0: i32, %arg1: i32, %arg2: i32) -> (i32, i32, i32, i32, i32) {
    %c0_i32 = arith.constant 0 : i32
    %c0_i32_0 = arith.constant 0 : i32
    %c0_i32_1 = arith.constant 0 : i32
    %c0_i32_2 = arith.constant 0 : i32
    return %arg0, %arg1, %c0_i32, %c0_i32_0, %c0_i32_1 : i32, i32, i32, i32, i32
  }
  func.func @transform_6(%arg0: i32, %arg1: i32, %arg2: i32) -> (i32, i32, i32, i32, i32) {
    %c0_i32 = arith.constant 0 : i32
    %c0_i32_0 = arith.constant 0 : i32
    %c0_i32_1 = arith.constant 0 : i32
    %c0_i32_2 = arith.constant 0 : i32
    return %arg0, %arg1, %c0_i32, %c0_i32_0, %c0_i32_1 : i32, i32, i32, i32, i32
  }
  func.func @transform_7(%arg0: i32, %arg1: i32, %arg2: i32) -> (i32, i32, i32, i32) {
    %c0_i32 = arith.constant 0 : i32
    %c0_i32_0 = arith.constant 0 : i32
    %c0_i32_1 = arith.constant 0 : i32
    return %arg0, %arg1, %c0_i32, %c0_i32_0 : i32, i32, i32, i32
  }
}

</mosaic_0001>

<llo_original>
// kernel: simcse_loss.1
$region0: #{simcse_loss.1}
  #allocation0 [shape = 'u32[]', space=smem, size = 0x4, offset = 0x4, fixed_abs, tag = 'smem constant byte address 0x4 - core index']
  #allocation1 [shape = 'u32[144,128]{1,0:T(1,128)}', space=vmem, size = 0x12000, scoped, tag = 'internal scratch']
  %s0 = inlined_call_operand.hbm [shape: f32[2,4,2,128], index: 0, kind: input, shape index: {}]
  %s1 = inlined_call_operand.hbm [shape: f32[2,4,2,128], index: 1, kind: input, shape index: {}]
  %s2 = inlined_call_operand.hbm [shape: f32[2,4,2,128], index: 2, kind: input, shape index: {}]
  %s3 = inlined_call_operand.hbm [shape: f32[2,4,2,128], index: 3, kind: input, shape index: {}]
  %s4 = inlined_call_operand.hbm [shape: f32[2,4,2,128], index: 4, kind: input, shape index: {}]
  %s5 = inlined_call_operand.hbm [shape: f32[2,1,4,4,128], index: 5, kind: output, shape index: {0}]
  %s6 = inlined_call_operand.hbm [shape: f32[2,1,4,4,128], index: 6, kind: output, shape index: {1}]
  %s7 = inlined_call_operand.hbm [shape: f32[2,1,4,128], index: 7, kind: output, shape index: {2}]
  %8 = xla_tuple %s5, %s6, %s7
  %s9 = sld [smem:[#allocation0]]
  $region93: #{simcse_loss.1} parent=0
    _
  %s11 = ssub.s32 1, %s9
  %s12 = scalar_select 0, %s11, %s9
  $region1: #{simcse_loss.1} parent=0
    #allocation2 [shape = 'u8[8192]{0}', space=vmem, size = 0x2000, scoped, tag = 'input window, operand 0']
    #allocation3 [shape = 's32[2]{0}', space=sflag, size = 0x8, scoped, tag = 'scoped memory for simcse_loss.1']
    #allocation4 [shape = 's32[2]{0}', space=sflag, size = 0x8, scoped, tag = 'scoped memory for simcse_loss.1']
    #allocation5 [shape = 'u8[8192]{0}', space=vmem, size = 0x2000, scoped, tag = 'input window, operand 1']
    #allocation6 [shape = 's32[2]{0}', space=sflag, size = 0x8, scoped, tag = 'scoped memory for simcse_loss.1']
    #allocation7 [shape = 'u8[8192]{0}', space=vmem, size = 0x2000, scoped, tag = 'input window, operand 2']
    #allocation8 [shape = 'u8[8192]{0}', space=vmem, size = 0x2000, scoped, tag = 'input window, operand 3']
    #allocation9 [shape = 's32[2]{0}', space=sflag, size = 0x8, scoped, tag = 'scoped memory for simcse_loss.1']
    #allocation10 [shape = 'u8[8192]{0}', space=vmem, size = 0x2000, scoped, tag = 'input window, operand 4']
    #allocation11 [shape = 'u8[16384]{0}', space=vmem, size = 0x4000, scoped, tag = 'output window, operand 0']
    #allocation12 [shape = 'u8[16384]{0}', space=vmem, size = 0x4000, scoped, tag = 'output window, operand 1']
    #allocation13 [shape = 's32[2]{0}', space=sflag, size = 0x8, scoped, tag = 'scoped memory for simcse_loss.1']
    #allocation14 [shape = 'u8[4096]{0}', space=vmem, size = 0x1000, scoped, tag = 'output window, operand 2']
    %13 = vsyncpa [#allocation3], 0
    %s14 = scalar_lea.sflag [#allocation3], 1
    %15 = vsyncpa %s14, 0
    %16 = vsyncpa [#allocation6], 0
    %s17 = scalar_lea.sflag [#allocation6], 1
    %18 = vsyncpa %s17, 0
    %19 = vsyncpa [#allocation9], 0
    %s20 = scalar_lea.sflag [#allocation9], 1
    %21 = vsyncpa %s20, 0
    %22 = vsyncpa [#allocation4], 0
    %s23 = scalar_lea.sflag [#allocation4], 1
    %24 = vsyncpa %s23, 0
    %25 = vsyncpa [#allocation13], 0
    %s26 = scalar_lea.sflag [#allocation13], 1
    %27 = vsyncpa %s26, 0
    loop: start=0, step=1, limit=4
    $region2: #{simcse_loss.1} parent=1 // loop_pre_header
      _
    $region3: #{simcse_loss.1} parent=1 // loop_header
      %s29 = sphi 0, %s33
      %p30 = scmp.ge.s32.totalorder %s29, 4
      %s36 = sphi 0, %s55
      %s37 = sphi 0, %s51
      %s38 = sphi 0, %s47
      %s39 = sphi 0, %s36
      %s40 = sphi 0, %s37
      %s41 = sphi 0, %s38
      %s42 = sphi 0, %s39
      %s43 = sphi 0, %s40
      %s44 = sphi 0, %s41
      %s66 = sphi 0, %s68
      %s69 = sphi 0, %s66
      %s70 = sphi 0, %s69
      %s86 = sphi 0, %s70
      %s100 = sphi 0, %s102
      %s103 = sphi 0, %s100
      %s104 = sphi 0, %s103
      %s120 = sphi 0, %s104
      %s134 = sphi 0, %s136
      %s137 = sphi 0, %s134
      %s138 = sphi 0, %s137
      %s154 = sphi 0, %s138
      %s168 = sphi 0, %s170
      %s171 = sphi 0, %s168
      %s172 = sphi 0, %s171
      %s188 = sphi 0, %s172
      %s202 = sphi 0, %s204
      %s205 = sphi 0, %s202
      %s206 = sphi 0, %s205
      %s222 = sphi 0, %s206
      %s230 = sphi 0, %s232
      %s233 = sphi 0, %s230
      %s234 = sphi 0, %s233
      %s250 = sphi 0, %s234
      %s258 = sphi 0, %s260
      %s261 = sphi 0, %s258
      %s262 = sphi 0, %s261
      %s278 = sphi 0, %s262
      %s286 = sphi 0, %s288
      %s289 = sphi 0, %s286
      %s290 = sphi 0, %s289
      %s306 = sphi 0, %s290
    $region4: #{simcse_loss.1} parent=1 // loop_header_branch
      %32 = sbr.rel (%p30) target = $region8
    $region5: #{simcse_loss.1} parent=1 // loop_body
      %s34 = ssub.s32 %s29, 1
      %s35 = ssub.s32 %s29, 2
      %s45 = sadd.s32 1, %s38
      %p46 = scmp.ge.s32.totalorder %s45, 1
      %s47 = scalar_select %p46, 0, %s45
      %s48 = sadd.s32 1, %s37
      %s49 = scalar_select %p46, %s48, %s37
      %p50 = scmp.ge.s32.totalorder %s49, 1
      %s51 = scalar_select %p50, 0, %s49
      %s52 = sadd.s32 1, %s36
      %s53 = scalar_select %p50, %s52, %s36
      %p54 = scmp.ge.s32.totalorder %s53, 2
      %s55 = scalar_select %p54, 0, %s53
      %s56 = sadd.s32 %s37, %s38
      %p57 = scmp.lt.s32.totalorder %s56, 0
      %s58 = scalar_select %p57, %s56, 0
      %s59 = sadd.s32 %s51, %s47
      %p60 = scmp.lt.s32.totalorder %s59, 0
      %s61 = scalar_select %p60, %s59, 0
      %s62 = ssub.s32 %s36, %s55
      %s63 = ssub.s32 %s58, %s61
      %s64 = sor.u32 %s62, %s63
      %p65 = scmp.eq.s32.totalorder %s64, 0
      %s67 = sadd.s32 %s66, 1
      %s68 = scalar_select %p65, %s66, %s67
      %p71 = pneg %p65
      %p72 = scmp.eq.s32.totalorder %s29, 1
      %p73 = por %p71, %p72
      %p74 = scmp.ne.s32.totalorder %s66, %s69
      %p75 = scmp.eq.s32.totalorder %s29, 0
      %p76 = por %p74, %p75
      %p77 = scmp.ne.s32.totalorder %s66, %s69
      %p78 = scmp.eq.s32.totalorder %s34, 1
      %p79 = por %p77, %p78
      %p80 = scmp.ne.s32.totalorder %s69, %s70
      %p81 = scmp.eq.s32.totalorder %s34, 0
      %p82 = por %p80, %p81
      %p83 = scmp.ne.s32.totalorder %s69, %s70
      %p84 = scmp.eq.s32.totalorder %s35, 1
      %p85 = por %p83, %p84
      %p87 = scmp.ne.s32.totalorder %s70, %s86
      %p88 = scmp.eq.s32.totalorder %s35, 0
      %p89 = por %p87, %p88
      %s90 = sadd.s32 %s37, %s38
      %p91 = scmp.lt.s32.totalorder %s90, 0
      %s92 = scalar_select %p91, %s90, 0
      %s93 = sadd.s32 %s51, %s47
      %p94 = scmp.lt.s32.totalorder %s93, 0
      %s95 = scalar_select %p94, %s93, 0
      %s96 = ssub.s32 %s36, %s55
      %s97 = ssub.s32 %s92, %s95
      %s98 = sor.u32 %s96, %s97
      %p99 = scmp.eq.s32.totalorder %s98, 0
      %s101 = sadd.s32 %s100, 1
      %s102 = scalar_select %p99, %s100, %s101
      %p105 = pneg %p99
      %p106 = scmp.eq.s32.totalorder %s29, 1
      %p107 = por %p105, %p106
      %p108 = scmp.ne.s32.totalorder %s100, %s103
      %p109 = scmp.eq.s32.totalorder %s29, 0
      %p110 = por %p108, %p109
      %p111 = scmp.ne.s32.totalorder %s100, %s103
      %p112 = scmp.eq.s32.totalorder %s34, 1
      %p113 = por %p111, %p112
      %p114 = scmp.ne.s32.totalorder %s103, %s104
      %p115 = scmp.eq.s32.totalorder %s34, 0
      %p116 = por %p114, %p115
      %p117 = scmp.ne.s32.totalorder %s103, %s104
      %p118 = scmp.eq.s32.totalorder %s35, 1
      %p119 = por %p117, %p118
      %p121 = scmp.ne.s32.totalorder %s104, %s120
      %p122 = scmp.eq.s32.totalorder %s35, 0
      %p123 = por %p121, %p122
      %s124 = sadd.s32 %s37, %s38
      %p125 = scmp.lt.s32.totalorder %s124, 0
      %s126 = scalar_select %p125, %s124, 0
      %s127 = sadd.s32 %s51, %s47
      %p128 = scmp.lt.s32.totalorder %s127, 0
      %s129 = scalar_select %p128, %s127, 0
      %s130 = ssub.s32 %s36, %s55
      %s131 = ssub.s32 %s126, %s129
      %s132 = sor.u32 %s130, %s131
      %p133 = scmp.eq.s32.totalorder %s132, 0
      %s135 = sadd.s32 %s134, 1
      %s136 = scalar_select %p133, %s134, %s135
      %p139 = pneg %p133
      %p140 = scmp.eq.s32.totalorder %s29, 1
      %p141 = por %p139, %p140
      %p142 = scmp.ne.s32.totalorder %s134, %s137
      %p143 = scmp.eq.s32.totalorder %s29, 0
      %p144 = por %p142, %p143
      %p145 = scmp.ne.s32.totalorder %s134, %s137
      %p146 = scmp.eq.s32.totalorder %s34, 1
      %p147 = por %p145, %p146
      %p148 = scmp.ne.s32.totalorder %s137, %s138
      %p149 = scmp.eq.s32.totalorder %s34, 0
      %p150 = por %p148, %p149
      %p151 = scmp.ne.s32.totalorder %s137, %s138
      %p152 = scmp.eq.s32.totalorder %s35, 1
      %p153 = por %p151, %p152
      %p155 = scmp.ne.s32.totalorder %s138, %s154
      %p156 = scmp.eq.s32.totalorder %s35, 0
      %p157 = por %p155, %p156
      %s158 = sadd.s32 %s37, %s38
      %p159 = scmp.lt.s32.totalorder %s158, 0
      %s160 = scalar_select %p159, %s158, 0
      %s161 = sadd.s32 %s51, %s47
      %p162 = scmp.lt.s32.totalorder %s161, 0
      %s163 = scalar_select %p162, %s161, 0
      %s164 = ssub.s32 %s36, %s55
      %s165 = ssub.s32 %s160, %s163
      %s166 = sor.u32 %s164, %s165
      %p167 = scmp.eq.s32.totalorder %s166, 0
      %s169 = sadd.s32 %s168, 1
      %s170 = scalar_select %p167, %s168, %s169
      %p173 = pneg %p167
      %p174 = scmp.eq.s32.totalorder %s29, 1
      %p175 = por %p173, %p174
      %p176 = scmp.ne.s32.totalorder %s168, %s171
      %p177 = scmp.eq.s32.totalorder %s29, 0
      %p178 = por %p176, %p177
      %p179 = scmp.ne.s32.totalorder %s168, %s171
      %p180 = scmp.eq.s32.totalorder %s34, 1
      %p181 = por %p179, %p180
      %p182 = scmp.ne.s32.totalorder %s171, %s172
      %p183 = scmp.eq.s32.totalorder %s34, 0
      %p184 = por %p182, %p183
      %p185 = scmp.ne.s32.totalorder %s171, %s172
      %p186 = scmp.eq.s32.totalorder %s35, 1
      %p187 = por %p185, %p186
      %p189 = scmp.ne.s32.totalorder %s172, %s188
      %p190 = scmp.eq.s32.totalorder %s35, 0
      %p191 = por %p189, %p190
      %s192 = sadd.s32 %s37, %s38
      %p193 = scmp.lt.s32.totalorder %s192, 0
      %s194 = scalar_select %p193, %s192, 0
      %s195 = sadd.s32 %s51, %s47
      %p196 = scmp.lt.s32.totalorder %s195, 0
      %s197 = scalar_select %p196, %s195, 0
      %s198 = ssub.s32 %s36, %s55
      %s199 = ssub.s32 %s194, %s197
      %s200 = sor.u32 %s198, %s199
      %p201 = scmp.eq.s32.totalorder %s200, 0
      %s203 = sadd.s32 %s202, 1
      %s204 = scalar_select %p201, %s202, %s203
      %p207 = pneg %p201
      %p208 = scmp.eq.s32.totalorder %s29, 1
      %p209 = por %p207, %p208
      %p210 = scmp.ne.s32.totalorder %s202, %s205
      %p211 = scmp.eq.s32.totalorder %s29, 0
      %p212 = por %p210, %p211
      %p213 = scmp.ne.s32.totalorder %s202, %s205
      %p214 = scmp.eq.s32.totalorder %s34, 1
      %p215 = por %p213, %p214
      %p216 = scmp.ne.s32.totalorder %s205, %s206
      %p217 = scmp.eq.s32.totalorder %s34, 0
      %p218 = por %p216, %p217
      %p219 = scmp.ne.s32.totalorder %s205, %s206
      %p220 = scmp.eq.s32.totalorder %s35, 1
      %p221 = por %p219, %p220
      %p223 = scmp.ne.s32.totalorder %s206, %s222
      %p224 = scmp.eq.s32.totalorder %s35, 0
      %p225 = por %p223, %p224
      %s226 = ssub.s32 %s36, %s55
      %s227 = ssub.s32 %s37, %s51
      %s228 = sor.u32 %s226, %s227
      %p229 = scmp.eq.s32.totalorder %s228, 0
      %s231 = sadd.s32 %s230, 1
      %s232 = scalar_select %p229, %s230, %s231
      %p235 = pneg %p229
      %p236 = scmp.eq.s32.totalorder %s29, 1
      %p237 = por %p235, %p236
      %p238 = scmp.ne.s32.totalorder %s230, %s233
      %p239 = scmp.eq.s32.totalorder %s29, 0
      %p240 = por %p238, %p239
      %p241 = scmp.ne.s32.totalorder %s230, %s233
      %p242 = scmp.eq.s32.totalorder %s34, 1
      %p243 = por %p241, %p242
      %p244 = scmp.ne.s32.totalorder %s233, %s234
      %p245 = scmp.eq.s32.totalorder %s34, 0
      %p246 = por %p244, %p245
      %p247 = scmp.ne.s32.totalorder %s233, %s234
      %p248 = scmp.eq.s32.totalorder %s35, 1
      %p249 = por %p247, %p248
      %p251 = scmp.ne.s32.totalorder %s234, %s250
      %p252 = scmp.eq.s32.totalorder %s35, 0
      %p253 = por %p251, %p252
      %s254 = ssub.s32 %s36, %s55
      %s255 = ssub.s32 %s37, %s51
      %s256 = sor.u32 %s254, %s255
      %p257 = scmp.eq.s32.totalorder %s256, 0
      %s259 = sadd.s32 %s258, 1
      %s260 = scalar_select %p257, %s258, %s259
      %p263 = pneg %p257
      %p264 = scmp.eq.s32.totalorder %s29, 1
      %p265 = por %p263, %p264
      %p266 = scmp.ne.s32.totalorder %s258, %s261
      %p267 = scmp.eq.s32.totalorder %s29, 0
      %p268 = por %p266, %p267
      %p269 = scmp.ne.s32.totalorder %s258, %s261
      %p270 = scmp.eq.s32.totalorder %s34, 1
      %p271 = por %p269, %p270
      %p272 = scmp.ne.s32.totalorder %s261, %s262
      %p273 = scmp.eq.s32.totalorder %s34, 0
      %p274 = por %p272, %p273
      %p275 = scmp.ne.s32.totalorder %s261, %s262
      %p276 = scmp.eq.s32.totalorder %s35, 1
      %p277 = por %p275, %p276
      %p279 = scmp.ne.s32.totalorder %s262, %s278
      %p280 = scmp.eq.s32.totalorder %s35, 0
      %p281 = por %p279, %p280
      %s282 = ssub.s32 %s36, %s55
      %s283 = ssub.s32 %s37, %s51
      %s284 = sor.u32 %s282, %s283
      %p285 = scmp.eq.s32.totalorder %s284, 0
      %s287 = sadd.s32 %s286, 1
      %s288 = scalar_select %p285, %s286, %s287
      %p291 = pneg %p285
      %p292 = scmp.eq.s32.totalorder %s29, 1
      %p293 = por %p291, %p292
      %p294 = scmp.ne.s32.totalorder %s286, %s289
      %p295 = scmp.eq.s32.totalorder %s29, 0
      %p296 = por %p294, %p295
      %p297 = scmp.ne.s32.totalorder %s286, %s289
      %p298 = scmp.eq.s32.totalorder %s34, 1
      %p299 = por %p297, %p298
      %p300 = scmp.ne.s32.totalorder %s289, %s290
      %p301 = scmp.eq.s32.totalorder %s34, 0
      %p302 = por %p300, %p301
      %p303 = scmp.ne.s32.totalorder %s289, %s290
      %p304 = scmp.eq.s32.totalorder %s35, 1
      %p305 = por %p303, %p304
      %p307 = scmp.ne.s32.totalorder %s290, %s306
      %p308 = scmp.eq.s32.totalorder %s35, 0
      %p309 = por %p307, %p308
      %p310 = scmp.le.s32.totalorder 1, %s29
      %p311 = scmp.lt.s32.totalorder %s29, 3
      %p312 = pnand %p310, %p311
      %p313 = pneg %p312
      // Predicated region
      $region9: #{simcse_loss.1} parent=5 // pred_check
        _
      $region10: #{simcse_loss.1} parent=5 // pred_check_branch
        %315 = sbr.rel (%p312) target = $region12
      $region11: #{simcse_loss.1} parent=5 // pred_region
        %s316 = ssub.s32 %s29, 1
      $region12: #{simcse_loss.1} parent=5 // pred_fallthru
        _
      %p317 = scmp.lt.s32.totalorder %s29, 2
      // Predicated region
      $region13: #{simcse_loss.1} parent=5 // pred_check
        %p318 = pneg %p317
      $region14: #{simcse_loss.1} parent=5 // pred_check_branch
        %320 = sbr.rel (%p318) target = $region16
      $region15: #{simcse_loss.1} parent=5 // pred_region
        // Predicated region
        $region17: #{simcse_loss.1} parent=15 // pred_check
          %p321 = pneg %p76
        $region18: #{simcse_loss.1} parent=15 // pred_check_branch
          %323 = sbr.rel (%p321) target = $region20
        $region19: #{simcse_loss.1} parent=15 // pred_region
          %s324 = sand.u32 %s66, 1
          %s325 = scalar_lea.sflag [#allocation3], %s324
          %s326 = sand.u32 %s66, 1
          %s327 = smul.addr %s326, 8
          %s328 = scalar_lea.vmem [#allocation2], %s327
          %s329 = sadd.s32 %s37, %s38
          %p330 = scmp.lt.s32.totalorder %s329, 0
          %s331 = scalar_select %p330, %s329, 0
          %s333 = ssub.s32 128, 128
          %334 = vsyncadd %s325, %s333
          %s335 = smul.addr %s36, 4
          %s336 = sadd.s32 %s331, %s335
          %s337 = smul.addr %s336, 32
          %s338 = scalar_lea.hbm %s0, %s337
          %s339 = sshll.u32 %s328, 4
          %s340 = int_to_ptr.vmem [resolvable:$true] %s339
          %345 = dma.hbm_to_vmem [thread:$0]  %s338, 128, %s340, %s325, 32, 32, 2
        $region20: #{simcse_loss.1} parent=15 // pred_fallthru
          _
        // Predicated region
        $region21: #{simcse_loss.1} parent=15 // pred_check
          %p346 = pneg %p110
        $region22: #{simcse_loss.1} parent=15 // pred_check_branch
          %348 = sbr.rel (%p346) target = $region24
        $region23: #{simcse_loss.1} parent=15 // pred_region
          %s349 = sand.u32 %s29, 1
          %s350 = scalar_lea.sflag [#allocation6], %s349
          %s351 = sand.u32 %s100, 1
          %s352 = smul.addr %s351, 8
          %s353 = scalar_lea.vmem [#allocation5], %s352
          %s354 = sadd.s32 %s37, %s38
          %p355 = scmp.lt.s32.totalorder %s354, 0
          %s356 = scalar_select %p355, %s354, 0
          %s358 = ssub.s32 128, 128
          %359 = vsyncadd %s350, %s358
          %s360 = smul.addr %s36, 4
          %s361 = sadd.s32 %s356, %s360
          %s362 = smul.addr %s361, 32
          %s363 = scalar_lea.hbm %s1, %s362
          %s364 = sshll.u32 %s353, 4
          %s365 = int_to_ptr.vmem [resolvable:$true] %s364
          %370 = dma.hbm_to_vmem [thread:$0]  %s363, 128, %s365, %s350, 32, 32, 2
        $region24: #{simcse_loss.1} parent=15 // pred_fallthru
          _
        // Predicated region
        $region25: #{simcse_loss.1} parent=15 // pred_check
          %p371 = pneg %p144
        $region26: #{simcse_loss.1} parent=15 // pred_check_branch
          %373 = sbr.rel (%p371) target = $region28
        $region27: #{simcse_loss.1} parent=15 // pred_region
          %s374 = sand.u32 %s29, 1
          %s375 = scalar_lea.sflag [#allocation6], %s374
          %s376 = sand.u32 %s134, 1
          %s377 = smul.addr %s376, 8
          %s378 = scalar_lea.vmem [#allocation7], %s377
          %s379 = sadd.s32 %s37, %s38
          %p380 = scmp.lt.s32.totalorder %s379, 0
          %s381 = scalar_select %p380, %s379, 0
          %s383 = ssub.s32 128, 128
          %384 = vsyncadd %s375, %s383
          %s385 = smul.addr %s36, 4
          %s386 = sadd.s32 %s381, %s385
          %s387 = smul.addr %s386, 32
          %s388 = scalar_lea.hbm %s2, %s387
          %s389 = sshll.u32 %s378, 4
          %s390 = int_to_ptr.vmem [resolvable:$true] %s389
          %395 = dma.hbm_to_vmem [thread:$0]  %s388, 128, %s390, %s375, 32, 32, 2
        $region28: #{simcse_loss.1} parent=15 // pred_fallthru
          _
        // Predicated region
        $region29: #{simcse_loss.1} parent=15 // pred_check
          %p396 = pneg %p178
        $region30: #{simcse_loss.1} parent=15 // pred_check_branch
          %398 = sbr.rel (%p396) target = $region32
        $region31: #{simcse_loss.1} parent=15 // pred_region
          %s399 = sand.u32 %s29, 1
          %s400 = scalar_lea.sflag [#allocation9], %s399
          %s401 = sand.u32 %s168, 1
          %s402 = smul.addr %s401, 8
          %s403 = scalar_lea.vmem [#allocation8], %s402
          %s404 = sadd.s32 %s37, %s38
          %p405 = scmp.lt.s32.totalorder %s404, 0
          %s406 = scalar_select %p405, %s404, 0
          %s408 = ssub.s32 128, 128
          %409 = vsyncadd %s400, %s408
          %s410 = smul.addr %s36, 4
          %s411 = sadd.s32 %s406, %s410
          %s412 = smul.addr %s411, 32
          %s413 = scalar_lea.hbm %s3, %s412
          %s414 = sshll.u32 %s403, 4
          %s415 = int_to_ptr.vmem [resolvable:$true] %s414
          %420 = dma.hbm_to_vmem [thread:$0]  %s413, 128, %s415, %s400, 32, 32, 2
        $region32: #{simcse_loss.1} parent=15 // pred_fallthru
          _
        // Predicated region
        $region33: #{simcse_loss.1} parent=15 // pred_check
          %p421 = pneg %p212
        $region34: #{simcse_loss.1} parent=15 // pred_check_branch
          %423 = sbr.rel (%p421) target = $region36
        $region35: #{simcse_loss.1} parent=15 // pred_region
          %s424 = sand.u32 %s29, 1
          %s425 = scalar_lea.sflag [#allocation9], %s424
          %s426 = sand.u32 %s202, 1
          %s427 = smul.addr %s426, 8
          %s428 = scalar_lea.vmem [#allocation10], %s427
          %s429 = sadd.s32 %s37, %s38
          %p430 = scmp.lt.s32.totalorder %s429, 0
          %s431 = scalar_select %p430, %s429, 0
          %s433 = ssub.s32 128, 128
          %434 = vsyncadd %s425, %s433
          %s435 = smul.addr %s36, 4
          %s436 = sadd.s32 %s431, %s435
          %s437 = smul.addr %s436, 32
          %s438 = scalar_lea.hbm %s4, %s437
          %s439 = sshll.u32 %s428, 4
          %s440 = int_to_ptr.vmem [resolvable:$true] %s439
          %445 = dma.hbm_to_vmem [thread:$0]  %s438, 128, %s440, %s425, 32, 32, 2
        $region36: #{simcse_loss.1} parent=15 // pred_fallthru
          _
      $region16: #{simcse_loss.1} parent=5 // pred_fallthru
        _
      %p446 = scmp.le.s32.totalorder 1, %s29
      %p447 = scmp.lt.s32.totalorder %s29, 3
      %p448 = pnand %p446, %p447
      %p449 = pneg %p448
      // Predicated region
      $region37: #{simcse_loss.1} parent=5 // pred_check
        _
      $region38: #{simcse_loss.1} parent=5 // pred_check_branch
        %451 = sbr.rel (%p448) target = $region40
      $region39: #{simcse_loss.1} parent=5 // pred_region
        %s452 = ssub.s32 %s29, 1
        %s453 = sand.u32 %s69, 1
        %s454 = scalar_lea.sflag [#allocation3], %s453
        %s455 = sand.u32 %s69, 1
        %s456 = smul.addr %s455, 8
        %s457 = scalar_lea.vmem [#allocation2], %s456
        // Predicated region
        $region41: #{simcse_loss.1} parent=39 // pred_check
          %p458 = pneg %p82
        $region42: #{simcse_loss.1} parent=39 // pred_check_branch
          %460 = sbr.rel (%p458) target = $region44
        $region43: #{simcse_loss.1} parent=39 // pred_region
          %461 = dma.done %s454, 128
        $region44: #{simcse_loss.1} parent=39 // pred_fallthru
          _
        %s462 = sand.u32 %s34, 1
        %s463 = scalar_lea.sflag [#allocation6], %s462
        %s464 = sand.u32 %s103, 1
        %s465 = smul.addr %s464, 8
        %s466 = scalar_lea.vmem [#allocation5], %s465
        // Predicated region
        $region45: #{simcse_loss.1} parent=39 // pred_check
          %p467 = pneg %p116
        $region46: #{simcse_loss.1} parent=39 // pred_check_branch
          %469 = sbr.rel (%p467) target = $region48
        $region47: #{simcse_loss.1} parent=39 // pred_region
          %470 = dma.done %s463, 128
        $region48: #{simcse_loss.1} parent=39 // pred_fallthru
          _
        %s471 = sand.u32 %s34, 1
        %s472 = scalar_lea.sflag [#allocation6], %s471
        %s473 = sand.u32 %s137, 1
        %s474 = smul.addr %s473, 8
        %s475 = scalar_lea.vmem [#allocation7], %s474
        // Predicated region
        $region49: #{simcse_loss.1} parent=39 // pred_check
          %p476 = pneg %p150
        $region50: #{simcse_loss.1} parent=39 // pred_check_branch
          %478 = sbr.rel (%p476) target = $region52
        $region51: #{simcse_loss.1} parent=39 // pred_region
          %479 = dma.done %s472, 128
        $region52: #{simcse_loss.1} parent=39 // pred_fallthru
          _
        %s480 = sand.u32 %s34, 1
        %s481 = scalar_lea.sflag [#allocation9], %s480
        %s482 = sand.u32 %s171, 1
        %s483 = smul.addr %s482, 8
        %s484 = scalar_lea.vmem [#allocation8], %s483
        // Predicated region
        $region53: #{simcse_loss.1} parent=39 // pred_check
          %p485 = pneg %p184
        $region54: #{simcse_loss.1} parent=39 // pred_check_branch
          %487 = sbr.rel (%p485) target = $region56
        $region55: #{simcse_loss.1} parent=39 // pred_region
          %488 = dma.done %s481, 128
        $region56: #{simcse_loss.1} parent=39 // pred_fallthru
          _
        %s489 = sand.u32 %s34, 1
        %s490 = scalar_lea.sflag [#allocation9], %s489
        %s491 = sand.u32 %s205, 1
        %s492 = smul.addr %s491, 8
        %s493 = scalar_lea.vmem [#allocation10], %s492
        // Predicated region
        $region57: #{simcse_loss.1} parent=39 // pred_check
          %p494 = pneg %p218
        $region58: #{simcse_loss.1} parent=39 // pred_check_branch
          %496 = sbr.rel (%p494) target = $region60
        $region59: #{simcse_loss.1} parent=39 // pred_region
          %497 = dma.done %s490, 128
        $region60: #{simcse_loss.1} parent=39 // pred_fallthru
          _
        %s498 = sand.u32 %s69, 1
        %s499 = scalar_lea.sflag [#allocation3], %s498
        %s500 = sand.u32 %s69, 1
        %s501 = smul.addr %s500, 8
        %s502 = scalar_lea.vmem [#allocation2], %s501
        %p503 = pneg %p82
        %p504 = pneg %p79
        %s505 = sand.u32 %s34, 1
        %s506 = scalar_lea.sflag [#allocation6], %s505
        %s507 = sand.u32 %s103, 1
        %s508 = smul.addr %s507, 8
        %s509 = scalar_lea.vmem [#allocation5], %s508
        %p510 = pneg %p116
        %p511 = pneg %p113
        %s512 = sand.u32 %s34, 1
        %s513 = scalar_lea.sflag [#allocation6], %s512
        %s514 = sand.u32 %s137, 1
        %s515 = smul.addr %s514, 8
        %s516 = scalar_lea.vmem [#allocation7], %s515
        %p517 = pneg %p150
        %p518 = pneg %p147
        %s519 = sand.u32 %s34, 1
        %s520 = scalar_lea.sflag [#allocation9], %s519
        %s521 = sand.u32 %s171, 1
        %s522 = smul.addr %s521, 8
        %s523 = scalar_lea.vmem [#allocation8], %s522
        %p524 = pneg %p184
        %p525 = pneg %p181
        %s526 = sand.u32 %s34, 1
        %s527 = scalar_lea.sflag [#allocation9], %s526
        %s528 = sand.u32 %s205, 1
        %s529 = smul.addr %s528, 8
        %s530 = scalar_lea.vmem [#allocation10], %s529
        %p531 = pneg %p218
        %p532 = pneg %p215
        %p533 = pneg %p246
        %p534 = pneg %p243
        %s535 = sand.u32 %s233, 1
        %s536 = scalar_lea.sflag [#allocation4], %s535
        %s537 = sand.u32 %s233, 1
        %s538 = smul.addr %s537, 16
        %s539 = scalar_lea.vmem [#allocation11], %s538
        %p540 = pneg %p274
        %p541 = pneg %p271
        %s542 = sand.u32 %s34, 1
        %s543 = scalar_lea.sflag [#allocation13], %s542
        %s544 = sand.u32 %s261, 1
        %s545 = smul.addr %s544, 16
        %s546 = scalar_lea.vmem [#allocation12], %s545
        %p547 = pneg %p302
        %p548 = pneg %p299
        %s549 = sand.u32 %s34, 1
        %s550 = scalar_lea.sflag [#allocation13], %s549
        %s551 = sand.u32 %s289, 1
        %s552 = smul.addr %s551, 4
        %s553 = scalar_lea.vmem [#allocation14], %s552
        %s554 = sadd.s32 %s40, %s41
        %p555 = scmp.lt.s32.totalorder %s554, 0
        %s556 = scalar_select %p555, %s554, 0
        %s557 = sadd.s32 %s40, %s41
        %p558 = scmp.lt.s32.totalorder %s557, 0
        %s559 = scalar_select %p558, %s557, 0
        %s560 = sadd.s32 %s40, %s41
        %p561 = scmp.lt.s32.totalorder %s560, 0
        %s562 = scalar_select %p561, %s560, 0
        %s563 = sadd.s32 %s40, %s41
        %p564 = scmp.lt.s32.totalorder %s563, 0
        %s565 = scalar_select %p564, %s563, 0
        %s566 = sadd.s32 %s40, %s41
        %p567 = scmp.lt.s32.totalorder %s566, 0
        %s568 = scalar_select %p567, %s566, 0
        %p569 = scmp.eq.s32.totalorder %s41, 0
        // Predicated region
        $region61: #{simcse_loss.1} parent=39 // pred_check
          %p570 = pneg %p569
        $region62: #{simcse_loss.1} parent=39 // pred_check_branch
          %572 = sbr.rel (%p570) target = $region64
        $region63: #{simcse_loss.1} parent=39 // pred_region
          %573 = vst [vmem:[%s539] sm:$0xf] 0.0
          %574 = vst [vmem:[%s539 + $0x4] sm:$0xf] 0.0
          %575 = vst [vmem:[%s539 + $0x8] sm:$0xf] 0.0
          %576 = vst [vmem:[%s539 + $0xc] sm:$0xf] 0.0
          %577 = vst [vmem:[%s546] sm:$0xf] 0.0
          %578 = vst [vmem:[%s546 + $0x4] sm:$0xf] 0.0
          %579 = vst [vmem:[%s546 + $0x8] sm:$0xf] 0.0
          %580 = vst [vmem:[%s546 + $0xc] sm:$0xf] 0.0
          %581 = vst [vmem:[%s553] sm:$0xf] 0.0
        $region64: #{simcse_loss.1} parent=39 // pred_fallthru
          _
        %s582 = sadd.s32 %s40, %s41
        %v583 = vlaneseq
        %v584 = vshrl.u32 %v583, 7
        %s585 = smul.u32 %s582, 2
        %v586 = vstv %s585
        %v587 = vadd.s32 %v584, %v586
        %vm588 = vcmp.lt.s32.totalorder %v587, 2
        %v589 = vld [vmem:[%s457] sm:$0x3]
        %v590 = vld [vmem:[%s457 + $0x2] sm:$0x3]
        %v591 = vld [vmem:[%s457 + $0x4] sm:$0x3]
        %v592 = vld [vmem:[%s457 + $0x6] sm:$0x3]
        %v593 = vsel %vm588, 1, 0
        %vm594 = vcmp.eq.s32.totalorder %v593, 1
        %v595 = vsel %vm594, %v589, 0.0
        %v596 = vsel %vm594, %v590, 0.0
        %v597 = vsel %vm594, %v591, 0.0
        %v598 = vsel %vm594, %v592, 0.0
        %v599 = vld [vmem:[%s553] sm:$0xf]
        %vm600 = vcmask 1041408
        %v601 = vsel %vm600, %v595, 0.0
        %v602 = vrot.slane %v601, 4
        %v603 = vadd.f32 %v601, %v602
        %v604 = vrot.slane %v603, 2
        %v605 = vadd.f32 %v603, %v604
        %v606 = vrot.slane %v605, 1
        %v607 = vadd.f32 %v605, %v606
        %v608 = vsel %vm600, %v596, 0.0
        %v609 = vrot.slane %v608, 4
        %v610 = vadd.f32 %v608, %v609
        %v611 = vrot.slane %v610, 2
        %v612 = vadd.f32 %v610, %v611
        %v613 = vrot.slane %v612, 1
        %v614 = vadd.f32 %v612, %v613
        %v615 = vsel %vm600, %v597, 0.0
        %v616 = vrot.slane %v615, 4
        %v617 = vadd.f32 %v615, %v616
        %v618 = vrot.slane %v617, 2
        %v619 = vadd.f32 %v617, %v618
        %v620 = vrot.slane %v619, 1
        %v621 = vadd.f32 %v619, %v620
        %v622 = vsel %vm600, %v598, 0.0
        %v623 = vrot.slane %v622, 4
        %v624 = vadd.f32 %v622, %v623
        %v625 = vrot.slane %v624, 2
        %v626 = vadd.f32 %v624, %v625
        %v627 = vrot.slane %v626, 1
        %v628 = vadd.f32 %v626, %v627
        %vm633 = vcmask 1041409
        %v634 = vsel %vm633, %v614, %v607
        %vm635 = vcmask 1042434
        %v636 = vsel %vm635, %v621, %v634
        %vm637 = vcmask 1043459
        %v638 = vsel %vm637, %v628, %v636
        %v640 = vadd.f32 %v599, %v638
        %641 = vst [vmem:[%s553] sm:$0xf] %v640
        %v642 = vld [vmem:[%s466] sm:$0x3]
        %v643 = vld [vmem:[%s466 + $0x2] sm:$0x3]
        %v644 = vld [vmem:[%s466 + $0x4] sm:$0x3]
        %v645 = vld [vmem:[%s466 + $0x6] sm:$0x3]
        %v646 = vsel %vm600, %v642, -inf
        %v647 = vsel %vm600, %v643, -inf
        %v648 = vsel %vm600, %v644, -inf
        %v649 = vsel %vm600, %v645, -inf
        %v650 = vmax.f32 %v646, %v647
        %v651 = vmax.f32 %v648, %v649
        %v652 = vmax.f32 %v650, %v651
        %v653 = vsub.f32 %v642, %v652
        %v654 = vsub.f32 %v643, %v652
        %v655 = vsub.f32 %v644, %v652
        %v656 = vsub.f32 %v645, %v652
        %v657 = vmul.f32 %v653, 1.442695
        %v658 = vpow.pop %v657
        %v659 = vmul.f32 %v654, 1.442695
        %v660 = vpow.pop %v659
        %v661 = vmul.f32 %v655, 1.442695
        %v662 = vpow.pop %v661
        %v663 = vmul.f32 %v656, 1.442695
        %v664 = vpow.pop %v663
        %v665 = vsel %vm600, %v658, 0.0
        %v666 = vsel %vm600, %v660, 0.0
        %v667 = vadd.f32 %v665, %v666
        %v668 = vsel %vm600, %v662, 0.0
        %v669 = vadd.f32 %v667, %v668
        %v670 = vsel %vm600, %v664, 0.0
        %v671 = vadd.f32 %v669, %v670
        %v672 = vrcp.pop %v671
        %v673 = vmul.f32 %v658, %v672
        %v674 = vmul.f32 %v660, %v672
        %v675 = vmul.f32 %v662, %v672
        %v676 = vmul.f32 %v664, %v672
        %v677 = vsel %vm594, %v673, 0.0
        %v678 = vsel %vm594, %v674, 0.0
        %v679 = vsel %vm594, %v675, 0.0
        %v680 = vsel %vm594, %v676, 0.0
        %v681 = vld [vmem:[%s539] sm:$0xf]
        %v682 = vmul.f32 %v677, %v595
        %v683 = vmul.f32 %v678, %v596
        %v684 = vmul.f32 %v679, %v597
        %v685 = vmul.f32 %v680, %v598
        %v686 = vsel %vm600, %v682, 0.0
        %v687 = vrot.slane %v686, 4
        %v688 = vadd.f32 %v686, %v687
        %v689 = vrot.slane %v688, 2
        %v690 = vadd.f32 %v688, %v689
        %v691 = vrot.slane %v690, 1
        %v692 = vadd.f32 %v690, %v691
        %v693 = vsel %vm600, %v683, 0.0
        %v694 = vrot.slane %v693, 4
        %v695 = vadd.f32 %v693, %v694
        %v696 = vrot.slane %v695, 2
        %v697 = vadd.f32 %v695, %v696
        %v698 = vrot.slane %v697, 1
        %v699 = vadd.f32 %v697, %v698
        %v700 = vsel %vm600, %v684, 0.0
        %v701 = vrot.slane %v700, 4
        %v702 = vadd.f32 %v700, %v701
        %v703 = vrot.slane %v702, 2
        %v704 = vadd.f32 %v702, %v703
        %v705 = vrot.slane %v704, 1
        %v706 = vadd.f32 %v704, %v705
        %v707 = vsel %vm600, %v685, 0.0
        %v708 = vrot.slane %v707, 4
        %v709 = vadd.f32 %v707, %v708
        %v710 = vrot.slane %v709, 2
        %v711 = vadd.f32 %v709, %v710
        %v712 = vrot.slane %v711, 1
        %v713 = vadd.f32 %v711, %v712
        %v718 = vsel %vm633, %v699, %v692
        %v719 = vsel %vm635, %v706, %v718
        %v720 = vsel %vm637, %v713, %v719
        %v722 = vadd.f32 %v681, %v720
        %723 = vst [vmem:[%s539] sm:$0xf] %v722
        %v724 = vld [vmem:[%s546] sm:$0xf]
        %v725 = vsel %vm600, %v677, 0.0
        %v726 = vrot.slane %v725, 4
        %v727 = vadd.f32 %v725, %v726
        %v728 = vrot.slane %v727, 2
        %v729 = vadd.f32 %v727, %v728
        %v730 = vrot.slane %v729, 1
        %v731 = vadd.f32 %v729, %v730
        %v732 = vsel %vm600, %v678, 0.0
        %v733 = vrot.slane %v732, 4
        %v734 = vadd.f32 %v732, %v733
        %v735 = vrot.slane %v734, 2
        %v736 = vadd.f32 %v734, %v735
        %v737 = vrot.slane %v736, 1
        %v738 = vadd.f32 %v736, %v737
        %v739 = vsel %vm600, %v679, 0.0
        %v740 = vrot.slane %v739, 4
        %v741 = vadd.f32 %v739, %v740
        %v742 = vrot.slane %v741, 2
        %v743 = vadd.f32 %v741, %v742
        %v744 = vrot.slane %v743, 1
        %v745 = vadd.f32 %v743, %v744
        %v746 = vsel %vm600, %v680, 0.0
        %v747 = vrot.slane %v746, 4
        %v748 = vadd.f32 %v746, %v747
        %v749 = vrot.slane %v748, 2
        %v750 = vadd.f32 %v748, %v749
        %v751 = vrot.slane %v750, 1
        %v752 = vadd.f32 %v750, %v751
        %v757 = vsel %vm633, %v738, %v731
        %v758 = vsel %vm635, %v745, %v757
        %v759 = vsel %vm637, %v752, %v758
        %v761 = vadd.f32 %v724, %v759
        %762 = vst [vmem:[%s546] sm:$0xf] %v761
        %v763 = vld [vmem:[%s475] sm:$0x3]
        %v764 = vld [vmem:[%s475 + $0x2] sm:$0x3]
        %v765 = vld [vmem:[%s475 + $0x4] sm:$0x3]
        %v766 = vld [vmem:[%s475 + $0x6] sm:$0x3]
        %v767 = vsel %vm600, %v763, -inf
        %v768 = vsel %vm600, %v764, -inf
        %v769 = vsel %vm600, %v765, -inf
        %v770 = vsel %vm600, %v766, -inf
        %v771 = vmax.f32 %v767, %v768
        %v772 = vmax.f32 %v769, %v770
        %v773 = vmax.f32 %v771, %v772
        %v774 = vsub.f32 %v763, %v773
        %v775 = vsub.f32 %v764, %v773
        %v776 = vsub.f32 %v765, %v773
        %v777 = vsub.f32 %v766, %v773
        %v778 = vmul.f32 %v774, 1.442695
        %v779 = vpow.pop %v778
        %v780 = vmul.f32 %v775, 1.442695
        %v781 = vpow.pop %v780
        %v782 = vmul.f32 %v776, 1.442695
        %v783 = vpow.pop %v782
        %v784 = vmul.f32 %v777, 1.442695
        %v785 = vpow.pop %v784
        %v786 = vsel %vm600, %v779, 0.0
        %v787 = vsel %vm600, %v781, 0.0
        %v788 = vadd.f32 %v786, %v787
        %v789 = vsel %vm600, %v783, 0.0
        %v790 = vadd.f32 %v788, %v789
        %v791 = vsel %vm600, %v785, 0.0
        %v792 = vadd.f32 %v790, %v791
        %v793 = vrcp.pop %v792
        %v794 = vmul.f32 %v779, %v793
        %v795 = vmul.f32 %v781, %v793
        %v796 = vmul.f32 %v783, %v793
        %v797 = vmul.f32 %v785, %v793
        %v798 = vsel %vm594, %v794, 0.0
        %v799 = vsel %vm594, %v795, 0.0
        %v800 = vsel %vm594, %v796, 0.0
        %v801 = vsel %vm594, %v797, 0.0
        %s802 = scalar_lea.vmem %s539, 4 [#allocation11]
        %v803 = vld [vmem:[%s802] sm:$0xf]
        %v804 = vmul.f32 %v798, %v595
        %v805 = vmul.f32 %v799, %v596
        %v806 = vmul.f32 %v800, %v597
        %v807 = vmul.f32 %v801, %v598
        %v808 = vsel %vm600, %v804, 0.0
        %v809 = vrot.slane %v808, 4
        %v810 = vadd.f32 %v808, %v809
        %v811 = vrot.slane %v810, 2
        %v812 = vadd.f32 %v810, %v811
        %v813 = vrot.slane %v812, 1
        %v814 = vadd.f32 %v812, %v813
        %v815 = vsel %vm600, %v805, 0.0
        %v816 = vrot.slane %v815, 4
        %v817 = vadd.f32 %v815, %v816
        %v818 = vrot.slane %v817, 2
        %v819 = vadd.f32 %v817, %v818
        %v820 = vrot.slane %v819, 1
        %v821 = vadd.f32 %v819, %v820
        %v822 = vsel %vm600, %v806, 0.0
        %v823 = vrot.slane %v822, 4
        %v824 = vadd.f32 %v822, %v823
        %v825 = vrot.slane %v824, 2
        %v826 = vadd.f32 %v824, %v825
        %v827 = vrot.slane %v826, 1
        %v828 = vadd.f32 %v826, %v827
        %v829 = vsel %vm600, %v807, 0.0
        %v830 = vrot.slane %v829, 4
        %v831 = vadd.f32 %v829, %v830
        %v832 = vrot.slane %v831, 2
        %v833 = vadd.f32 %v831, %v832
        %v834 = vrot.slane %v833, 1
        %v835 = vadd.f32 %v833, %v834
        %v840 = vsel %vm633, %v821, %v814
        %v841 = vsel %vm635, %v828, %v840
        %v842 = vsel %vm637, %v835, %v841
        %v844 = vadd.f32 %v803, %v842
        %845 = vst [vmem:[%s802] sm:$0xf] %v844
        %s846 = scalar_lea.vmem %s546, 4 [#allocation12]
        %v847 = vld [vmem:[%s846] sm:$0xf]
        %v848 = vsel %vm600, %v798, 0.0
        %v849 = vrot.slane %v848, 4
        %v850 = vadd.f32 %v848, %v849
        %v851 = vrot.slane %v850, 2
        %v852 = vadd.f32 %v850, %v851
        %v853 = vrot.slane %v852, 1
        %v854 = vadd.f32 %v852, %v853
        %v855 = vsel %vm600, %v799, 0.0
        %v856 = vrot.slane %v855, 4
        %v857 = vadd.f32 %v855, %v856
        %v858 = vrot.slane %v857, 2
        %v859 = vadd.f32 %v857, %v858
        %v860 = vrot.slane %v859, 1
        %v861 = vadd.f32 %v859, %v860
        %v862 = vsel %vm600, %v800, 0.0
        %v863 = vrot.slane %v862, 4
        %v864 = vadd.f32 %v862, %v863
        %v865 = vrot.slane %v864, 2
        %v866 = vadd.f32 %v864, %v865
        %v867 = vrot.slane %v866, 1
        %v868 = vadd.f32 %v866, %v867
        %v869 = vsel %vm600, %v801, 0.0
        %v870 = vrot.slane %v869, 4
        %v871 = vadd.f32 %v869, %v870
        %v872 = vrot.slane %v871, 2
        %v873 = vadd.f32 %v871, %v872
        %v874 = vrot.slane %v873, 1
        %v875 = vadd.f32 %v873, %v874
        %v880 = vsel %vm633, %v861, %v854
        %v881 = vsel %vm635, %v868, %v880
        %v882 = vsel %vm637, %v875, %v881
        %v884 = vadd.f32 %v847, %v882
        %885 = vst [vmem:[%s846] sm:$0xf] %v884
        %v886 = vld [vmem:[%s484] sm:$0x3]
        %v887 = vld [vmem:[%s484 + $0x2] sm:$0x3]
        %v888 = vld [vmem:[%s484 + $0x4] sm:$0x3]
        %v889 = vld [vmem:[%s484 + $0x6] sm:$0x3]
        %v890 = vsel %vm600, %v886, -inf
        %v891 = vsel %vm600, %v887, -inf
        %v892 = vsel %vm600, %v888, -inf
        %v893 = vsel %vm600, %v889, -inf
        %v894 = vmax.f32 %v890, %v891
        %v895 = vmax.f32 %v892, %v893
        %v896 = vmax.f32 %v894, %v895
        %v897 = vsub.f32 %v886, %v896
        %v898 = vsub.f32 %v887, %v896
        %v899 = vsub.f32 %v888, %v896
        %v900 = vsub.f32 %v889, %v896
        %v901 = vmul.f32 %v897, 1.442695
        %v902 = vpow.pop %v901
        %v903 = vmul.f32 %v898, 1.442695
        %v904 = vpow.pop %v903
        %v905 = vmul.f32 %v899, 1.442695
        %v906 = vpow.pop %v905
        %v907 = vmul.f32 %v900, 1.442695
        %v908 = vpow.pop %v907
        %v909 = vsel %vm600, %v902, 0.0
        %v910 = vsel %vm600, %v904, 0.0
        %v911 = vadd.f32 %v909, %v910
        %v912 = vsel %vm600, %v906, 0.0
        %v913 = vadd.f32 %v911, %v912
        %v914 = vsel %vm600, %v908, 0.0
        %v915 = vadd.f32 %v913, %v914
        %v916 = vrcp.pop %v915
        %v917 = vmul.f32 %v902, %v916
        %v918 = vmul.f32 %v904, %v916
        %v919 = vmul.f32 %v906, %v916
        %v920 = vmul.f32 %v908, %v916
        %v921 = vsel %vm594, %v917, 0.0
        %v922 = vsel %vm594, %v918, 0.0
        %v923 = vsel %vm594, %v919, 0.0
        %v924 = vsel %vm594, %v920, 0.0
        %s925 = scalar_lea.vmem %s539, 8 [#allocation11]
        %v926 = vld [vmem:[%s925] sm:$0xf]
        %v927 = vmul.f32 %v921, %v595
        %v928 = vmul.f32 %v922, %v596
        %v929 = vmul.f32 %v923, %v597
        %v930 = vmul.f32 %v924, %v598
        %v931 = vsel %vm600, %v927, 0.0
        %v932 = vrot.slane %v931, 4
        %v933 = vadd.f32 %v931, %v932
        %v934 = vrot.slane %v933, 2
        %v935 = vadd.f32 %v933, %v934
        %v936 = vrot.slane %v935, 1
        %v937 = vadd.f32 %v935, %v936
        %v938 = vsel %vm600, %v928, 0.0
        %v939 = vrot.slane %v938, 4
        %v940 = vadd.f32 %v938, %v939
        %v941 = vrot.slane %v940, 2
        %v942 = vadd.f32 %v940, %v941
        %v943 = vrot.slane %v942, 1
        %v944 = vadd.f32 %v942, %v943
        %v945 = vsel %vm600, %v929, 0.0
        %v946 = vrot.slane %v945, 4
        %v947 = vadd.f32 %v945, %v946
        %v948 = vrot.slane %v947, 2
        %v949 = vadd.f32 %v947, %v948
        %v950 = vrot.slane %v949, 1
        %v951 = vadd.f32 %v949, %v950
        %v952 = vsel %vm600, %v930, 0.0
        %v953 = vrot.slane %v952, 4
        %v954 = vadd.f32 %v952, %v953
        %v955 = vrot.slane %v954, 2
        %v956 = vadd.f32 %v954, %v955
        %v957 = vrot.slane %v956, 1
        %v958 = vadd.f32 %v956, %v957
        %v963 = vsel %vm633, %v944, %v937
        %v964 = vsel %vm635, %v951, %v963
        %v965 = vsel %vm637, %v958, %v964
        %v967 = vadd.f32 %v926, %v965
        %968 = vst [vmem:[%s925] sm:$0xf] %v967
        %s969 = scalar_lea.vmem %s546, 8 [#allocation12]
        %v970 = vld [vmem:[%s969] sm:$0xf]
        %v971 = vsel %vm600, %v921, 0.0
        %v972 = vrot.slane %v971, 4
        %v973 = vadd.f32 %v971, %v972
        %v974 = vrot.slane %v973, 2
        %v975 = vadd.f32 %v973, %v974
        %v976 = vrot.slane %v975, 1
        %v977 = vadd.f32 %v975, %v976
        %v978 = vsel %vm600, %v922, 0.0
        %v979 = vrot.slane %v978, 4
        %v980 = vadd.f32 %v978, %v979
        %v981 = vrot.slane %v980, 2
        %v982 = vadd.f32 %v980, %v981
        %v983 = vrot.slane %v982, 1
        %v984 = vadd.f32 %v982, %v983
        %v985 = vsel %vm600, %v923, 0.0
        %v986 = vrot.slane %v985, 4
        %v987 = vadd.f32 %v985, %v986
        %v988 = vrot.slane %v987, 2
        %v989 = vadd.f32 %v987, %v988
        %v990 = vrot.slane %v989, 1
        %v991 = vadd.f32 %v989, %v990
        %v992 = vsel %vm600, %v924, 0.0
        %v993 = vrot.slane %v992, 4
        %v994 = vadd.f32 %v992, %v993
        %v995 = vrot.slane %v994, 2
        %v996 = vadd.f32 %v994, %v995
        %v997 = vrot.slane %v996, 1
        %v998 = vadd.f32 %v996, %v997
        %v1003 = vsel %vm633, %v984, %v977
        %v1004 = vsel %vm635, %v991, %v1003
        %v1005 = vsel %vm637, %v998, %v1004
        %v1007 = vadd.f32 %v970, %v1005
        %1008 = vst [vmem:[%s969] sm:$0xf] %v1007
        %v1009 = vld [vmem:[%s493] sm:$0x3]
        %v1010 = vld [vmem:[%s493 + $0x2] sm:$0x3]
        %v1011 = vld [vmem:[%s493 + $0x4] sm:$0x3]
        %v1012 = vld [vmem:[%s493 + $0x6] sm:$0x3]
        %v1013 = vsel %vm600, %v1009, -inf
        %v1014 = vsel %vm600, %v1010, -inf
        %v1015 = vsel %vm600, %v1011, -inf
        %v1016 = vsel %vm600, %v1012, -inf
        %v1017 = vmax.f32 %v1013, %v1014
        %v1018 = vmax.f32 %v1015, %v1016
        %v1019 = vmax.f32 %v1017, %v1018
        %v1020 = vsub.f32 %v1009, %v1019
        %v1021 = vsub.f32 %v1010, %v1019
        %v1022 = vsub.f32 %v1011, %v1019
        %v1023 = vsub.f32 %v1012, %v1019
        %v1024 = vmul.f32 %v1020, 1.442695
        %v1025 = vpow.pop %v1024
        %v1026 = vmul.f32 %v1021, 1.442695
        %v1027 = vpow.pop %v1026
        %v1028 = vmul.f32 %v1022, 1.442695
        %v1029 = vpow.pop %v1028
        %v1030 = vmul.f32 %v1023, 1.442695
        %v1031 = vpow.pop %v1030
        %v1032 = vsel %vm600, %v1025, 0.0
        %v1033 = vsel %vm600, %v1027, 0.0
        %v1034 = vadd.f32 %v1032, %v1033
        %v1035 = vsel %vm600, %v1029, 0.0
        %v1036 = vadd.f32 %v1034, %v1035
        %v1037 = vsel %vm600, %v1031, 0.0
        %v1038 = vadd.f32 %v1036, %v1037
        %v1039 = vrcp.pop %v1038
        %v1040 = vmul.f32 %v1025, %v1039
        %v1041 = vmul.f32 %v1027, %v1039
        %v1042 = vmul.f32 %v1029, %v1039
        %v1043 = vmul.f32 %v1031, %v1039
        %v1044 = vsel %vm594, %v1040, 0.0
        %v1045 = vsel %vm594, %v1041, 0.0
        %v1046 = vsel %vm594, %v1042, 0.0
        %v1047 = vsel %vm594, %v1043, 0.0
        %s1048 = scalar_lea.vmem %s539, 12 [#allocation11]
        %v1049 = vld [vmem:[%s1048] sm:$0xf]
        %v1050 = vmul.f32 %v1044, %v595
        %v1051 = vmul.f32 %v1045, %v596
        %v1052 = vmul.f32 %v1046, %v597
        %v1053 = vmul.f32 %v1047, %v598
        %v1054 = vsel %vm600, %v1050, 0.0
        %v1055 = vrot.slane %v1054, 4
        %v1056 = vadd.f32 %v1054, %v1055
        %v1057 = vrot.slane %v1056, 2
        %v1058 = vadd.f32 %v1056, %v1057
        %v1059 = vrot.slane %v1058, 1
        %v1060 = vadd.f32 %v1058, %v1059
        %v1061 = vsel %vm600, %v1051, 0.0
        %v1062 = vrot.slane %v1061, 4
        %v1063 = vadd.f32 %v1061, %v1062
        %v1064 = vrot.slane %v1063, 2
        %v1065 = vadd.f32 %v1063, %v1064
        %v1066 = vrot.slane %v1065, 1
        %v1067 = vadd.f32 %v1065, %v1066
        %v1068 = vsel %vm600, %v1052, 0.0
        %v1069 = vrot.slane %v1068, 4
        %v1070 = vadd.f32 %v1068, %v1069
        %v1071 = vrot.slane %v1070, 2
        %v1072 = vadd.f32 %v1070, %v1071
        %v1073 = vrot.slane %v1072, 1
        %v1074 = vadd.f32 %v1072, %v1073
        %v1075 = vsel %vm600, %v1053, 0.0
        %v1076 = vrot.slane %v1075, 4
        %v1077 = vadd.f32 %v1075, %v1076
        %v1078 = vrot.slane %v1077, 2
        %v1079 = vadd.f32 %v1077, %v1078
        %v1080 = vrot.slane %v1079, 1
        %v1081 = vadd.f32 %v1079, %v1080
        %v1086 = vsel %vm633, %v1067, %v1060
        %v1087 = vsel %vm635, %v1074, %v1086
        %v1088 = vsel %vm637, %v1081, %v1087
        %v1090 = vadd.f32 %v1049, %v1088
        %1091 = vst [vmem:[%s1048] sm:$0xf] %v1090
        %s1092 = scalar_lea.vmem %s546, 12 [#allocation12]
        %v1093 = vld [vmem:[%s1092] sm:$0xf]
        %v1094 = vsel %vm600, %v1044, 0.0
        %v1095 = vrot.slane %v1094, 4
        %v1096 = vadd.f32 %v1094, %v1095
        %v1097 = vrot.slane %v1096, 2
        %v1098 = vadd.f32 %v1096, %v1097
        %v1099 = vrot.slane %v1098, 1
        %v1100 = vadd.f32 %v1098, %v1099
        %v1101 = vsel %vm600, %v1045, 0.0
        %v1102 = vrot.slane %v1101, 4
        %v1103 = vadd.f32 %v1101, %v1102
        %v1104 = vrot.slane %v1103, 2
        %v1105 = vadd.f32 %v1103, %v1104
        %v1106 = vrot.slane %v1105, 1
        %v1107 = vadd.f32 %v1105, %v1106
        %v1108 = vsel %vm600, %v1046, 0.0
        %v1109 = vrot.slane %v1108, 4
        %v1110 = vadd.f32 %v1108, %v1109
        %v1111 = vrot.slane %v1110, 2
        %v1112 = vadd.f32 %v1110, %v1111
        %v1113 = vrot.slane %v1112, 1
        %v1114 = vadd.f32 %v1112, %v1113
        %v1115 = vsel %vm600, %v1047, 0.0
        %v1116 = vrot.slane %v1115, 4
        %v1117 = vadd.f32 %v1115, %v1116
        %v1118 = vrot.slane %v1117, 2
        %v1119 = vadd.f32 %v1117, %v1118
        %v1120 = vrot.slane %v1119, 1
        %v1121 = vadd.f32 %v1119, %v1120
        %v1126 = vsel %vm633, %v1107, %v1100
        %v1127 = vsel %vm635, %v1114, %v1126
        %v1128 = vsel %vm637, %v1121, %v1127
        %v1130 = vadd.f32 %v1093, %v1128
        %1131 = vst [vmem:[%s1092] sm:$0xf] %v1130
        %s1132 = sand.u32 %s233, 1
        %s1133 = scalar_lea.sflag [#allocation4], %s1132
        %s1134 = sand.u32 %s233, 1
        %s1135 = smul.addr %s1134, 16
        %s1136 = scalar_lea.vmem [#allocation11], %s1135
        %s1137 = sand.u32 %s34, 1
        %s1138 = scalar_lea.sflag [#allocation13], %s1137
        %s1139 = sand.u32 %s261, 1
        %s1140 = smul.addr %s1139, 16
        %s1141 = scalar_lea.vmem [#allocation12], %s1140
        %s1142 = sand.u32 %s34, 1
        %s1143 = scalar_lea.sflag [#allocation13], %s1142
        %s1144 = sand.u32 %s289, 1
        %s1145 = smul.addr %s1144, 4
        %s1146 = scalar_lea.vmem [#allocation14], %s1145
        // Predicated region
        $region65: #{simcse_loss.1} parent=39 // pred_check
          %p1147 = pneg %p243
        $region66: #{simcse_loss.1} parent=39 // pred_check_branch
          %1149 = sbr.rel (%p1147) target = $region68
        $region67: #{simcse_loss.1} parent=39 // pred_region
          %s1151 = ssub.s32 256, 256
          %1152 = vsyncadd %s1133, %s1151
          %s1153 = smul.addr %s40, 4
          %s1154 = smul.addr %s39, 4
          %s1155 = sadd.s32 %s1153, %s1154
          %s1156 = smul.addr %s1155, 64
          %s1157 = scalar_lea.hbm %s5, %s1156
          %s1158 = sshll.u32 %s1136, 4
          %s1159 = int_to_ptr.vmem [resolvable:$true] %s1158
          %1164 = dma.vmem_to_hbm [thread:$0]  %s1159, 256, %s1157, %s1133, 64, 64, 4
        $region68: #{simcse_loss.1} parent=39 // pred_fallthru
          _
        // Predicated region
        $region69: #{simcse_loss.1} parent=39 // pred_check
          %p1165 = pneg %p271
        $region70: #{simcse_loss.1} parent=39 // pred_check_branch
          %1167 = sbr.rel (%p1165) target = $region72
        $region71: #{simcse_loss.1} parent=39 // pred_region
          %s1169 = ssub.s32 256, 256
          %1170 = vsyncadd %s1138, %s1169
          %s1171 = smul.addr %s40, 4
          %s1172 = smul.addr %s39, 4
          %s1173 = sadd.s32 %s1171, %s1172
          %s1174 = smul.addr %s1173, 64
          %s1175 = scalar_lea.hbm %s6, %s1174
          %s1176 = sshll.u32 %s1141, 4
          %s1177 = int_to_ptr.vmem [resolvable:$true] %s1176
          %1182 = dma.vmem_to_hbm [thread:$0]  %s1177, 256, %s1175, %s1138, 64, 64, 4
        $region72: #{simcse_loss.1} parent=39 // pred_fallthru
          _
        // Predicated region
        $region73: #{simcse_loss.1} parent=39 // pred_check
          %p1183 = pneg %p299
        $region74: #{simcse_loss.1} parent=39 // pred_check_branch
          %1185 = sbr.rel (%p1183) target = $region76
        $region75: #{simcse_loss.1} parent=39 // pred_region
          %s1187 = ssub.s32 64, 64
          %1188 = vsyncadd %s1143, %s1187
          %s1189 = sadd.s32 %s40, %s39
          %s1190 = smul.addr %s1189, 64
          %s1191 = scalar_lea.hbm %s7, %s1190
          %s1193 = sshll.u32 %s1146, 4
          %s1194 = int_to_ptr.vmem [resolvable:$true] %s1193
          %1196 = dma.vmem_to_hbm [thread:$0]  %s1194, 64, %s1191, %s1143
        $region76: #{simcse_loss.1} parent=39 // pred_fallthru
          _
      $region40: #{simcse_loss.1} parent=5 // pred_fallthru
        _
      %p1197 = scmp.le.s32.totalorder 2, %s29
      // Predicated region
      $region77: #{simcse_loss.1} parent=5 // pred_check
        %p1198 = pneg %p1197
      $region78: #{simcse_loss.1} parent=5 // pred_check_branch
        %1200 = sbr.rel (%p1198) target = $region80
      $region79: #{simcse_loss.1} parent=5 // pred_region
        %s1201 = ssub.s32 %s29, 2
        // Predicated region
        $region81: #{simcse_loss.1} parent=79 // pred_check
          %p1202 = pneg %p249
        $region82: #{simcse_loss.1} parent=79 // pred_check_branch
          %1204 = sbr.rel (%p1202) target = $region84
        $region83: #{simcse_loss.1} parent=79 // pred_region
          %s1205 = sand.u32 %s234, 1
          %s1206 = scalar_lea.sflag [#allocation4], %s1205
          %s1207 = sand.u32 %s234, 1
          %s1208 = smul.addr %s1207, 16
          %s1209 = scalar_lea.vmem [#allocation11], %s1208
          %1210 = dma.done %s1206, 256
        $region84: #{simcse_loss.1} parent=79 // pred_fallthru
          _
        // Predicated region
        $region85: #{simcse_loss.1} parent=79 // pred_check
          %p1211 = pneg %p277
        $region86: #{simcse_loss.1} parent=79 // pred_check_branch
          %1213 = sbr.rel (%p1211) target = $region88
        $region87: #{simcse_loss.1} parent=79 // pred_region
          %s1214 = sand.u32 %s35, 1
          %s1215 = scalar_lea.sflag [#allocation13], %s1214
          %s1216 = sand.u32 %s262, 1
          %s1217 = smul.addr %s1216, 16
          %s1218 = scalar_lea.vmem [#allocation12], %s1217
          %1219 = dma.done %s1215, 256
        $region88: #{simcse_loss.1} parent=79 // pred_fallthru
          _
        // Predicated region
        $region89: #{simcse_loss.1} parent=79 // pred_check
          %p1220 = pneg %p305
        $region90: #{simcse_loss.1} parent=79 // pred_check_branch
          %1222 = sbr.rel (%p1220) target = $region92
        $region91: #{simcse_loss.1} parent=79 // pred_region
          %s1223 = sand.u32 %s35, 1
          %s1224 = scalar_lea.sflag [#allocation13], %s1223
          %s1225 = sand.u32 %s290, 1
          %s1226 = smul.addr %s1225, 4
          %s1227 = scalar_lea.vmem [#allocation14], %s1226
          %1228 = dma.done %s1224, 64
        $region92: #{simcse_loss.1} parent=79 // pred_fallthru
          _
      $region80: #{simcse_loss.1} parent=5 // pred_fallthru
        _
    $region6: #{simcse_loss.1} parent=1 // loop_footer
      %s33 = sadd.s32 1, %s29
    $region7: #{simcse_loss.1} parent=1 // loop_footer_branch
      %28 = sbr.rel target = $region3
    $region8: #{simcse_loss.1} parent=1 // loop_exit
      _
    %1229 = vsyncpa [#allocation3], 1
    %s1230 = scalar_lea.sflag [#allocation3], 1
    %1231 = vsyncpa %s1230, 1
    %1232 = vsyncpa [#allocation6], 1
    %s1233 = scalar_lea.sflag [#allocation6], 1
    %1234 = vsyncpa %s1233, 1
    %1235 = vsyncpa [#allocation9], 1
    %s1236 = scalar_lea.sflag [#allocation9], 1
    %1237 = vsyncpa %s1236, 1
    %1238 = vsyncpa [#allocation4], 1
    %s1239 = scalar_lea.sflag [#allocation4], 1
    %1240 = vsyncpa %s1239, 1
    %1241 = vsyncpa [#allocation13], 1
    %s1242 = scalar_lea.sflag [#allocation13], 1
    %1243 = vsyncpa %s1242, 1

</llo_original>
